<compile_context>
chip_gen: v7x
topology: tpu7x:2x2x1
jax: 0.10.0
libtpu: 0.0.40
codegen_flags: <defaults>
</compile_context>

<pallas_src>
import jax
import jax.numpy as jnp
from jax.experimental import pallas as pl
from jax.experimental.pallas import tpu as pltpu


def attn_block_kernel(left_ref, right_ref, target_ref, w_ref, b_ref, out_ref):
    """Fused AttentionBLock forward for one batch tile.

    left/right/target : (bt, N*, df)   sequence tiles (matmul dtype, e.g. bf16)
    w_ref             : (df, 4*(dv+df)) packed [WV0|M0 | WV1|M1 | WV2|M2 | WV3|M3]
    b_ref             : (1,  4*(dv+df)) packed biases (fp32)
    out_ref           : (bt, 4*dv)      lane-dense [r_l | r_r | r_l_t | r_r_t]
    """
    bt, n_l, df = left_ref.shape
    n_r = right_ref.shape[1]
    n_t = target_ref.shape[1]
    dv = out_ref.shape[-1] // 4
    dw = dv + df                      # one head's fused [V | P] width
    wtot = 4 * dw                     # packed width of all 4 heads
    n_tot = n_l + n_r + n_t
    mm_dtype = w_ref.dtype

    # Upcast to fp32 so every layout op (concat/reshape) and all VPU/EUP math runs
    # in fp32 with (8,128)-aligned tiles; the MXU operands are cast back below.
    lf = left_ref[...].astype(jnp.float32)
    rf = right_ref[...].astype(jnp.float32)
    tf = target_ref[...].astype(jnp.float32)

    # Single MXU pass: all rows of all three sequences x the packed 4-head slab.
    x2 = jnp.concatenate([lf, rf, tf], axis=1).reshape(bt * n_tot, df)
    y2 = jnp.dot(x2.astype(mm_dtype), w_ref[...],
                 preferred_element_type=jnp.float32) + b_ref[...]      # (bt*n_tot, 4*dw)
    y = y2.reshape(bt, n_tot, wtot)                                    # fp32

    # r_t = mean over target rows (fp32 accumulate).
    r_t = jnp.mean(tf, axis=1, keepdims=True)                          # (bt, 1, df)

    def place_query(q, head):
        # Zero-pad the (bt,1,df) query into head `head`'s score lanes of the packed
        # row: the score reduce then runs on full lane-dense vregs and the value
        # lanes contribute exactly zero (no O(N) lane slices needed).
        lo = head * dw + dv
        hi = wtot - lo - df
        parts = [jnp.zeros(q.shape[:-1] + (lo,), jnp.float32), q]
        if hi:
            parts.append(jnp.zeros(q.shape[:-1] + (hi,), jnp.float32))
        return jnp.concatenate(parts, axis=-1)                          # (bt, 1, 4*dw)

    def attend(rows, q_pad, head):
        # rows: (bt, n, 4*dw) full-width tile; q_pad: (bt, 1, 4*dw) padded query.
        e = jnp.tanh(jnp.sum(rows * q_pad, axis=-1, keepdims=True))     # (bt, n, 1)
        w = jnp.exp(e - jnp.max(e, axis=1, keepdims=True))              # (bt, n, 1)
        # Pooling: broadcast-mul + sublane reduce (no w.T, no M=1 matmul).
        u = jnp.sum(rows * w, axis=1, keepdims=True)[:, 0]              # (bt, 4*dw)
        denom = jnp.sum(w, axis=1, keepdims=True)[:, 0]                 # (bt, 1)
        inv = 1.0 / denom                                               # exact divide
        lo = head * dw
        return u[:, lo:lo + dv] * inv                                   # (bt, dv)

    y_l = y[:, :n_l, :]
    y_r = y[:, n_l:n_l + n_r, :]
    y_t = y[:, n_l + n_r:, :]

    r_l = attend(y_l, place_query(r_t, 0), 0)
    r_r = attend(y_r, place_query(r_t, 1), 1)
    # df == dv (checked at pack time): r_l / r_r feed back as the queries.
    r_l_t = attend(y_t, place_query(r_l[:, None, :], 2), 2)
    r_r_t = attend(y_t, place_query(r_r[:, None, :], 3), 3)

    out_ref[...] = jnp.concatenate([r_l, r_r, r_l_t, r_r_t], axis=-1)


def pack_params(params, matmul_dtype=jnp.bfloat16):
    """One-time fold + packing of the 4 SingleAttention parameter sets.

    Score path folds algebraically: (x@WK + bK)@W + bW == x@M + c.  Per head we
    pack [WV | M] side by side; the 4 heads are laid out lane-dense in one
    (df, 4*(dv+df)) slab.  Head order: 0=target->left, 1=target->right,
    2=left->target, 3=right->target.  Keep OUT of the per-forward path.
    """
    WK, bK, WV, bV, W, bW = (params["WK"], params["bK"], params["WV"],
                             params["bV"], params["W"], params["bW"])
    df, dv = WK.shape[1], WV.shape[-1]
    if df != dv:
        raise ValueError("AttentionBLock feeds r_l/r_r back as queries: requires "
                         f"df == dv (got df={df}, dv={dv}).")
    M = jnp.einsum("hik,hkj->hij", WK, W)                 # (4, df, df)
    c = jnp.einsum("hok,hkj->hoj", bK, W) + bW            # (4, 1, df)
    Wf = jnp.concatenate([WV, M], axis=-1)                # (4, df, dv+df)
    bf = jnp.concatenate([bV, c], axis=-1)                # (4, 1, dv+df)
    w_all = jnp.concatenate([Wf[h] for h in range(4)], axis=-1)   # (df, 4*(dv+df))
    b_all = jnp.concatenate([bf[h] for h in range(4)], axis=-1)   # (1,  4*(dv+df))
    return w_all.astype(matmul_dtype), b_all.astype(jnp.float32)


def attention_block_batched(left, target, right, w_all, b_all, *, batch_tile=8):
    """Batched forward: (B, N, df) triples -> (B, 4*dv) rows."""
    B, _, df = target.shape
    n_l, n_r, n_t = left.shape[1], right.shape[1], target.shape[1]
    dw = w_all.shape[-1] // 4
    dv = dw - df
    mm_dtype = w_all.dtype

    bt = max(1, min(batch_tile, B))
    b_pad = pl.cdiv(B, bt) * bt
    pad = b_pad - B
    if pad:  # zero-padded batches produce finite garbage that is sliced away below
        left = jnp.pad(left, ((0, pad), (0, 0), (0, 0)))
        right = jnp.pad(right, ((0, pad), (0, 0), (0, 0)))
        target = jnp.pad(target, ((0, pad), (0, 0), (0, 0)))
    left = left.astype(mm_dtype)
    right = right.astype(mm_dtype)
    target = target.astype(mm_dtype)

    # VMEM residency estimate per grid step (double-buffered inputs + fp32
    # intermediates).  Raise a clear error instead of a compile-time OOM; long
    # sequences need the N-tiled online-softmax variant (see TODO at top).
    itemsize = jnp.dtype(mm_dtype).itemsize
    in_bytes = bt * (n_l + n_r + n_t) * df * itemsize
    w_bytes = (df + 1) * 4 * dw * itemsize
    y_bytes = bt * (n_l + n_r + n_t) * 4 * dw * 4
    est = 2 * (in_bytes + w_bytes) + 3 * y_bytes + (1 << 20)
    if est > 44 * 2**20:        # keep headroom on v7x's 64 MiB physical VMEM
        raise ValueError(f"~{est >> 20} MiB per grid step exceeds safe VMEM; reduce "
                         "batch_tile or use an N-tiled online-softmax variant.")
    vmem_limit = 64 * 2**20 if est > 12 * 2**20 else None   # v5e default scope is 16 MiB

    out = pl.pallas_call(
        attn_block_kernel,
        out_shape=jax.ShapeDtypeStruct((b_pad, 4 * dv), jnp.float32),
        grid=(b_pad // bt,),
        in_specs=[
            pl.BlockSpec((bt, n_l, df), lambda b: (b, 0, 0)),
            pl.BlockSpec((bt, n_r, df), lambda b: (b, 0, 0)),
            pl.BlockSpec((bt, n_t, df), lambda b: (b, 0, 0)),
            pl.BlockSpec((df, 4 * dw), lambda b: (0, 0)),   # weights stay VMEM-resident
            pl.BlockSpec((1, 4 * dw), lambda b: (0, 0)),
        ],
        out_specs=pl.BlockSpec((bt, 4 * dv), lambda b: (b, 0)),
        compiler_params=pltpu.CompilerParams(
            dimension_semantics=("parallel",),
            vmem_limit_bytes=vmem_limit),
    )(left, right, target, w_all, b_all)
    return out[:B] if pad else out


def attention_block(left, target, right, params, matmul_dtype=jnp.float32):
    """Module-faithful single-triple forward: (N, df) inputs -> (4*dv,) output."""
    w_all, b_all = pack_params(params, matmul_dtype)
    out = attention_block_batched(left[None], target[None], right[None], w_all, b_all)
    return out[0]


def jax_reference(left, target, right, params):
    """Pure-JAX fp32 reference mirroring the PyTorch module (unfused weights)."""
    WK, bK, WV, bV, W, bW = (params["WK"], params["bK"], params["WV"],
                             params["bV"], params["W"], params["bW"])

    def single_attention(i, r, x):
        K = x @ WK[i] + bK[i, 0]
        V = x @ WV[i] + bV[i, 0]
        e = jnp.tanh((K @ W[i] + bW[i, 0]) @ r)
        a = jax.nn.softmax(e, axis=0)
        return V.T @ a

    r_t = jnp.mean(target, axis=0)
    r_l = single_attention(0, r_t, left)
    r_r = single_attention(1, r_t, right)
    r_l_t = single_attention(2, r_l, target)
    r_r_t = single_attention(3, r_r, target)
    return jnp.concatenate([r_l, r_r, r_l_t, r_r_t])


def init_params(key, df, dk, dv):
    """Deterministic synthetic init of the 4 SingleAttention modules.

    PyTorch Linear weight is (out, in); we store the pre-transposed (in, out) form.
    """
    keys = jax.random.split(key, 6)
    scale = 0.1
    return {
        "WK": scale * jax.random.normal(keys[0], (4, df, dk), jnp.float32),
        "bK": scale * jax.random.normal(keys[1], (4, 1, dk), jnp.float32),
        "WV": scale * jax.random.normal(keys[2], (4, df, dv), jnp.float32),
        "bV": scale * jax.random.normal(keys[3], (4, 1, dv), jnp.float32),
        "W":  scale * jax.random.normal(keys[4], (4, dk, df), jnp.float32),
        "bW": scale * jax.random.normal(keys[5], (4, 1, df), jnp.float32),
    }


if __name__ == "__main__":
    # Small shapes consistent with the module: batches of (sequence, feature)
    # triples; df == dv is required because queries are re-used down the chain.
    B, N, df, dk, dv = 16, 8, 32, 16, 32

    key = jax.random.PRNGKey(0)
    k_l, k_t, k_r, k_p = jax.random.split(key, 4)
    left = jax.random.normal(k_l, (B, N, df), jnp.float32)
    target = jax.random.normal(k_t, (B, N, df), jnp.float32)
    right = jax.random.normal(k_r, (B, N, df), jnp.float32)
    params = init_params(k_p, df, dk, dv)

    ref = jax.vmap(lambda l, t, r: jax_reference(l, t, r, params))(left, target, right)

    # fp32 matmul operands: only the algebraic weight fold + default MXU precision
    # reassociate fp math -> tight tolerance.
    w32, b32 = pack_params(params, jnp.float32)
    fwd32 = jax.jit(lambda l, t, r: attention_block_batched(l, t, r, w32, b32))
    out32 = jax.block_until_ready(fwd32(left, target, right))
    assert out32.shape == (B, 4 * dv), out32.shape
    assert jnp.allclose(out32, ref, atol=3e-3, rtol=3e-3), (
        f"fp32 max abs err = {jnp.max(jnp.abs(out32 - ref))}")

    # bf16 matmul operands (default performance path): tolerance budget is the
    # ~2^-8 relative operand rounding propagated through the two-stage chain.
    wbf, bbf = pack_params(params, jnp.bfloat16)
    fwdbf = jax.jit(lambda l, t, r: attention_block_batched(l, t, r, wbf, bbf))
    outbf = jax.block_until_ready(fwdbf(left, target, right))
    assert outbf.shape == (B, 4 * dv), outbf.shape
    assert jnp.allclose(outbf, ref, atol=2e-2, rtol=2e-2), (
        f"bf16 max abs err = {jnp.max(jnp.abs(outbf - ref))}")

    # Module-interface single-triple path (degenerate batch of 1).
    out1 = jax.block_until_ready(attention_block(left[0], target[0], right[0], params))
    assert jnp.allclose(out1, ref[0], atol=3e-3, rtol=3e-3), (
        f"single max abs err = {jnp.max(jnp.abs(out1 - ref[0]))}")

    print("KERNEL_OK")
</pallas_src>

<mosaic_0001>
module attributes {stable_mosaic.version = 11 : i64} {
  func.func @attn_block_kernel(%arg0: i32, %arg1: memref<8x8x32xf32, #tpu.memory_space<vmem>>, %arg2: memref<8x8x32xf32, #tpu.memory_space<vmem>>, %arg3: memref<8x8x32xf32, #tpu.memory_space<vmem>>, %arg4: memref<32x256xf32, #tpu.memory_space<vmem>>, %arg5: memref<1x256xf32, #tpu.memory_space<vmem>>, %arg6: memref<8x128xf32, #tpu.memory_space<vmem>>) attributes {dimension_semantics = [#tpu.dimension_semantics<parallel>], iteration_bounds = array<i64: 2>, scalar_prefetch = 0 : i64, scratch_operands = 0 : i64, tpu.core_type = #tpu.core_type<tc>, window_params = [{transform_indices = @transform_0, window_bounds = array<i64: 8, 8, 32>}, {transform_indices = @transform_1, window_bounds = array<i64: 8, 8, 32>}, {transform_indices = @transform_2, window_bounds = array<i64: 8, 8, 32>}, {pipeline_mode = #tpu.pipeline_mode<synchronous>, transform_indices = @transform_3, window_bounds = array<i64: 32, 256>}, {pipeline_mode = #tpu.pipeline_mode<synchronous>, transform_indices = @transform_4, window_bounds = array<i64: 1, 256>}, {transform_indices = @transform_5, window_bounds = array<i64: 8, 128>}]} {
    %c0 = arith.constant 0 : index
    %c0_0 = arith.constant 0 : index
    %c0_1 = arith.constant 0 : index
    %0 = vector.load %arg1[%c0, %c0_0, %c0_1] : memref<8x8x32xf32, #tpu.memory_space<vmem>>, vector<8x8x32xf32>
    %c0_2 = arith.constant 0 : index
    %c0_3 = arith.constant 0 : index
    %c0_4 = arith.constant 0 : index
    %1 = vector.load %arg2[%c0_2, %c0_3, %c0_4] : memref<8x8x32xf32, #tpu.memory_space<vmem>>, vector<8x8x32xf32>
    %c0_5 = arith.constant 0 : index
    %c0_6 = arith.constant 0 : index
    %c0_7 = arith.constant 0 : index
    %2 = vector.load %arg3[%c0_5, %c0_6, %c0_7] : memref<8x8x32xf32, #tpu.memory_space<vmem>>, vector<8x8x32xf32>
    %3 = tpu.concatenate %0, %1, %2 in 1 : vector<8x8x32xf32>, vector<8x8x32xf32>, vector<8x8x32xf32> -> vector<8x24x32xf32>
    %4 = vector.shape_cast %3 : vector<8x24x32xf32> to vector<192x32xf32>
    %c0_8 = arith.constant 0 : index
    %c0_9 = arith.constant 0 : index
    %5 = vector.load %arg4[%c0_8, %c0_9] : memref<32x256xf32, #tpu.memory_space<vmem>>, vector<32x256xf32>
    %cst = arith.constant dense<0.000000e+00> : vector<192x256xf32>
    %6 = tpu.matmul %4, %5, %cst {dimension_numbers = #tpu.dot_dimension_numbers<[1], [0], [0], [1], [0, 0, 1, 1], [], []>} : vector<192x32xf32>, vector<32x256xf32>, vector<192x256xf32> -> vector<192x256xf32>
    %c0_10 = arith.constant 0 : index
    %c0_11 = arith.constant 0 : index
    %7 = vector.load %arg5[%c0_10, %c0_11] : memref<1x256xf32, #tpu.memory_space<vmem>>, vector<1x256xf32>
    %8 = vector.broadcast %7 : vector<1x256xf32> to vector<192x256xf32>
    %9 = arith.addf %6, %8 : vector<192x256xf32>
    %10 = vector.shape_cast %9 : vector<192x256xf32> to vector<8x24x256xf32>
    %cst_12 = arith.constant dense<0.000000e+00> : vector<8x32xf32>
    %11 = vector.multi_reduction <add>, %2, %cst_12 [1] : vector<8x8x32xf32> to vector<8x32xf32>
    %12 = vector.shape_cast %11 : vector<8x32xf32> to vector<8x1x32xf32>
    %cst_13 = arith.constant 8.000000e+00 : f32
    %13 = vector.broadcast %cst_13 : f32 to vector<8x1x32xf32>
    %14 = arith.divf %12, %13 : vector<8x1x32xf32>
    %15 = vector.extract_strided_slice %10 {offsets = [0, 0, 0], sizes = [8, 8, 256], strides = [1, 1, 1]} : vector<8x24x256xf32> to vector<8x8x256xf32>
    %16 = vector.extract_strided_slice %10 {offsets = [0, 8, 0], sizes = [8, 8, 256], strides = [1, 1, 1]} : vector<8x24x256xf32> to vector<8x8x256xf32>
    %17 = vector.extract_strided_slice %10 {offsets = [0, 16, 0], sizes = [8, 8, 256], strides = [1, 1, 1]} : vector<8x24x256xf32> to vector<8x8x256xf32>
    %cst_14 = arith.constant 0.000000e+00 : f32
    %18 = vector.broadcast %cst_14 : f32 to vector<8x1x32xf32>
    %cst_15 = arith.constant 0.000000e+00 : f32
    %19 = vector.broadcast %cst_15 : f32 to vector<8x1x192xf32>
    %20 = tpu.concatenate %18, %14, %19 in 2 : vector<8x1x32xf32>, vector<8x1x32xf32>, vector<8x1x192xf32> -> vector<8x1x256xf32>
    %21 = vector.broadcast %20 : vector<8x1x256xf32> to vector<8x8x256xf32>
    %22 = arith.mulf %15, %21 : vector<8x8x256xf32>
    %cst_16 = arith.constant dense<0.000000e+00> : vector<8x8xf32>
    %23 = vector.multi_reduction <add>, %22, %cst_16 [2] : vector<8x8x256xf32> to vector<8x8xf32>
    %24 = vector.shape_cast %23 : vector<8x8xf32> to vector<8x8x1xf32>
    %25 = math.tanh %24 : vector<8x8x1xf32>
    %cst_17 = arith.constant dense<0xFF800000> : vector<8x1xf32>
    %26 = vector.multi_reduction <maximumf>, %25, %cst_17 [1] : vector<8x8x1xf32> to vector<8x1xf32>
    %27 = vector.shape_cast %26 : vector<8x1xf32> to vector<8x1x1xf32>
    %28 = vector.broadcast %27 : vector<8x1x1xf32> to vector<8x8x1xf32>
    %29 = arith.subf %25, %28 : vector<8x8x1xf32>
    %30 = math.exp %29 : vector<8x8x1xf32>
    %31 = vector.broadcast %30 : vector<8x8x1xf32> to vector<8x8x256xf32>
    %32 = arith.mulf %15, %31 : vector<8x8x256xf32>
    %cst_18 = arith.constant dense<0.000000e+00> : vector<8x256xf32>
    %33 = vector.multi_reduction <add>, %32, %cst_18 [1] : vector<8x8x256xf32> to vector<8x256xf32>
    %34 = vector.shape_cast %33 : vector<8x256xf32> to vector<8x1x256xf32>
    %35 = vector.shape_cast %34 : vector<8x1x256xf32> to vector<8x256xf32>
    %cst_19 = arith.constant dense<0.000000e+00> : vector<8x1xf32>
    %36 = vector.multi_reduction <add>, %30, %cst_19 [1] : vector<8x8x1xf32> to vector<8x1xf32>
    %37 = vector.shape_cast %36 : vector<8x1xf32> to vector<8x1x1xf32>
    %38 = vector.shape_cast %37 : vector<8x1x1xf32> to vector<8x1xf32>
    %cst_20 = arith.constant 1.000000e+00 : f32
    %39 = vector.broadcast %cst_20 : f32 to vector<8x1xf32>
    %40 = arith.divf %39, %38 : vector<8x1xf32>
    %41 = vector.extract_strided_slice %35 {offsets = [0, 0], sizes = [8, 32], strides = [1, 1]} : vector<8x256xf32> to vector<8x32xf32>
    %42 = vector.broadcast %40 : vector<8x1xf32> to vector<8x32xf32>
    %43 = arith.mulf %41, %42 : vector<8x32xf32>
    %cst_21 = arith.constant 0.000000e+00 : f32
    %44 = vector.broadcast %cst_21 : f32 to vector<8x1x96xf32>
    %cst_22 = arith.constant 0.000000e+00 : f32
    %45 = vector.broadcast %cst_22 : f32 to vector<8x1x128xf32>
    %46 = tpu.concatenate %44, %14, %45 in 2 : vector<8x1x96xf32>, vector<8x1x32xf32>, vector<8x1x128xf32> -> vector<8x1x256xf32>
    %47 = vector.broadcast %46 : vector<8x1x256xf32> to vector<8x8x256xf32>
    %48 = arith.mulf %16, %47 : vector<8x8x256xf32>
    %cst_23 = arith.constant dense<0.000000e+00> : vector<8x8xf32>
    %49 = vector.multi_reduction <add>, %48, %cst_23 [2] : vector<8x8x256xf32> to vector<8x8xf32>
    %50 = vector.shape_cast %49 : vector<8x8xf32> to vector<8x8x1xf32>
    %51 = math.tanh %50 : vector<8x8x1xf32>
    %cst_24 = arith.constant dense<0xFF800000> : vector<8x1xf32>
    %52 = vector.multi_reduction <maximumf>, %51, %cst_24 [1] : vector<8x8x1xf32> to vector<8x1xf32>
    %53 = vector.shape_cast %52 : vector<8x1xf32> to vector<8x1x1xf32>
    %54 = vector.broadcast %53 : vector<8x1x1xf32> to vector<8x8x1xf32>
    %55 = arith.subf %51, %54 : vector<8x8x1xf32>
    %56 = math.exp %55 : vector<8x8x1xf32>
    %57 = vector.broadcast %56 : vector<8x8x1xf32> to vector<8x8x256xf32>
    %58 = arith.mulf %16, %57 : vector<8x8x256xf32>
    %cst_25 = arith.constant dense<0.000000e+00> : vector<8x256xf32>
    %59 = vector.multi_reduction <add>, %58, %cst_25 [1] : vector<8x8x256xf32> to vector<8x256xf32>
    %60 = vector.shape_cast %59 : vector<8x256xf32> to vector<8x1x256xf32>
    %61 = vector.shape_cast %60 : vector<8x1x256xf32> to vector<8x256xf32>
    %cst_26 = arith.constant dense<0.000000e+00> : vector<8x1xf32>
    %62 = vector.multi_reduction <add>, %56, %cst_26 [1] : vector<8x8x1xf32> to vector<8x1xf32>
    %63 = vector.shape_cast %62 : vector<8x1xf32> to vector<8x1x1xf32>
    %64 = vector.shape_cast %63 : vector<8x1x1xf32> to vector<8x1xf32>
    %cst_27 = arith.constant 1.000000e+00 : f32
    %65 = vector.broadcast %cst_27 : f32 to vector<8x1xf32>
    %66 = arith.divf %65, %64 : vector<8x1xf32>
    %67 = vector.extract_strided_slice %61 {offsets = [0, 64], sizes = [8, 32], strides = [1, 1]} : vector<8x256xf32> to vector<8x32xf32>
    %68 = vector.broadcast %66 : vector<8x1xf32> to vector<8x32xf32>
    %69 = arith.mulf %67, %68 : vector<8x32xf32>
    %70 = vector.shape_cast %43 : vector<8x32xf32> to vector<8x1x32xf32>
    %cst_28 = arith.constant 0.000000e+00 : f32
    %71 = vector.broadcast %cst_28 : f32 to vector<8x1x160xf32>
    %cst_29 = arith.constant 0.000000e+00 : f32
    %72 = vector.broadcast %cst_29 : f32 to vector<8x1x64xf32>
    %73 = tpu.concatenate %71, %70, %72 in 2 : vector<8x1x160xf32>, vector<8x1x32xf32>, vector<8x1x64xf32> -> vector<8x1x256xf32>
    %74 = vector.broadcast %73 : vector<8x1x256xf32> to vector<8x8x256xf32>
    %75 = arith.mulf %17, %74 : vector<8x8x256xf32>
    %cst_30 = arith.constant dense<0.000000e+00> : vector<8x8xf32>
    %76 = vector.multi_reduction <add>, %75, %cst_30 [2] : vector<8x8x256xf32> to vector<8x8xf32>
    %77 = vector.shape_cast %76 : vector<8x8xf32> to vector<8x8x1xf32>
    %78 = math.tanh %77 : vector<8x8x1xf32>
    %cst_31 = arith.constant dense<0xFF800000> : vector<8x1xf32>
    %79 = vector.multi_reduction <maximumf>, %78, %cst_31 [1] : vector<8x8x1xf32> to vector<8x1xf32>
    %80 = vector.shape_cast %79 : vector<8x1xf32> to vector<8x1x1xf32>
    %81 = vector.broadcast %80 : vector<8x1x1xf32> to vector<8x8x1xf32>
    %82 = arith.subf %78, %81 : vector<8x8x1xf32>
    %83 = math.exp %82 : vector<8x8x1xf32>
    %84 = vector.broadcast %83 : vector<8x8x1xf32> to vector<8x8x256xf32>
    %85 = arith.mulf %17, %84 : vector<8x8x256xf32>
    %cst_32 = arith.constant dense<0.000000e+00> : vector<8x256xf32>
    %86 = vector.multi_reduction <add>, %85, %cst_32 [1] : vector<8x8x256xf32> to vector<8x256xf32>
    %87 = vector.shape_cast %86 : vector<8x256xf32> to vector<8x1x256xf32>
    %88 = vector.shape_cast %87 : vector<8x1x256xf32> to vector<8x256xf32>
    %cst_33 = arith.constant dense<0.000000e+00> : vector<8x1xf32>
    %89 = vector.multi_reduction <add>, %83, %cst_33 [1] : vector<8x8x1xf32> to vector<8x1xf32>
    %90 = vector.shape_cast %89 : vector<8x1xf32> to vector<8x1x1xf32>
    %91 = vector.shape_cast %90 : vector<8x1x1xf32> to vector<8x1xf32>
    %cst_34 = arith.constant 1.000000e+00 : f32
    %92 = vector.broadcast %cst_34 : f32 to vector<8x1xf32>
    %93 = arith.divf %92, %91 : vector<8x1xf32>
    %94 = vector.extract_strided_slice %88 {offsets = [0, 128], sizes = [8, 32], strides = [1, 1]} : vector<8x256xf32> to vector<8x32xf32>
    %95 = vector.broadcast %93 : vector<8x1xf32> to vector<8x32xf32>
    %96 = arith.mulf %94, %95 : vector<8x32xf32>
    %97 = vector.shape_cast %69 : vector<8x32xf32> to vector<8x1x32xf32>
    %cst_35 = arith.constant 0.000000e+00 : f32
    %98 = vector.broadcast %cst_35 : f32 to vector<8x1x224xf32>
    %99 = tpu.concatenate %98, %97 in 2 : vector<8x1x224xf32>, vector<8x1x32xf32> -> vector<8x1x256xf32>
    %100 = vector.broadcast %99 : vector<8x1x256xf32> to vector<8x8x256xf32>
    %101 = arith.mulf %17, %100 : vector<8x8x256xf32>
    %cst_36 = arith.constant dense<0.000000e+00> : vector<8x8xf32>
    %102 = vector.multi_reduction <add>, %101, %cst_36 [2] : vector<8x8x256xf32> to vector<8x8xf32>
    %103 = vector.shape_cast %102 : vector<8x8xf32> to vector<8x8x1xf32>
    %104 = math.tanh %103 : vector<8x8x1xf32>
    %cst_37 = arith.constant dense<0xFF800000> : vector<8x1xf32>
    %105 = vector.multi_reduction <maximumf>, %104, %cst_37 [1] : vector<8x8x1xf32> to vector<8x1xf32>
    %106 = vector.shape_cast %105 : vector<8x1xf32> to vector<8x1x1xf32>
    %107 = vector.broadcast %106 : vector<8x1x1xf32> to vector<8x8x1xf32>
    %108 = arith.subf %104, %107 : vector<8x8x1xf32>
    %109 = math.exp %108 : vector<8x8x1xf32>
    %110 = vector.broadcast %109 : vector<8x8x1xf32> to vector<8x8x256xf32>
    %111 = arith.mulf %17, %110 : vector<8x8x256xf32>
    %cst_38 = arith.constant dense<0.000000e+00> : vector<8x256xf32>
    %112 = vector.multi_reduction <add>, %111, %cst_38 [1] : vector<8x8x256xf32> to vector<8x256xf32>
    %113 = vector.shape_cast %112 : vector<8x256xf32> to vector<8x1x256xf32>
    %114 = vector.shape_cast %113 : vector<8x1x256xf32> to vector<8x256xf32>
    %cst_39 = arith.constant dense<0.000000e+00> : vector<8x1xf32>
    %115 = vector.multi_reduction <add>, %109, %cst_39 [1] : vector<8x8x1xf32> to vector<8x1xf32>
    %116 = vector.shape_cast %115 : vector<8x1xf32> to vector<8x1x1xf32>
    %117 = vector.shape_cast %116 : vector<8x1x1xf32> to vector<8x1xf32>
    %cst_40 = arith.constant 1.000000e+00 : f32
    %118 = vector.broadcast %cst_40 : f32 to vector<8x1xf32>
    %119 = arith.divf %118, %117 : vector<8x1xf32>
    %120 = vector.extract_strided_slice %114 {offsets = [0, 192], sizes = [8, 32], strides = [1, 1]} : vector<8x256xf32> to vector<8x32xf32>
    %121 = vector.broadcast %119 : vector<8x1xf32> to vector<8x32xf32>
    %122 = arith.mulf %120, %121 : vector<8x32xf32>
    %123 = tpu.concatenate %43, %69, %96, %122 in 1 : vector<8x32xf32>, vector<8x32xf32>, vector<8x32xf32>, vector<8x32xf32> -> vector<8x128xf32>
    %c0_41 = arith.constant 0 : index
    %c0_42 = arith.constant 0 : index
    %124 = vector.load %arg6[%c0_41, %c0_42] : memref<8x128xf32, #tpu.memory_space<vmem>>, vector<8x128xf32>
    tpu.vector_store %arg6[%c0_41, %c0_42], %123 {strides = array<i32>} : memref<8x128xf32, #tpu.memory_space<vmem>>, vector<8x128xf32>,
    return
  }
  func.func @transform_0(%arg0: i32) -> (i32, i32, i32) {
    %c0_i32 = arith.constant 0 : i32
    %c0_i32_0 = arith.constant 0 : i32
    %c0_i32_1 = arith.constant 0 : i32
    return %arg0, %c0_i32, %c0_i32_0 : i32, i32, i32
  }
  func.func @transform_1(%arg0: i32) -> (i32, i32, i32) {
    %c0_i32 = arith.constant 0 : i32
    %c0_i32_0 = arith.constant 0 : i32
    %c0_i32_1 = arith.constant 0 : i32
    return %arg0, %c0_i32, %c0_i32_0 : i32, i32, i32
  }
  func.func @transform_2(%arg0: i32) -> (i32, i32, i32) {
    %c0_i32 = arith.constant 0 : i32
    %c0_i32_0 = arith.constant 0 : i32
    %c0_i32_1 = arith.constant 0 : i32
    return %arg0, %c0_i32, %c0_i32_0 : i32, i32, i32
  }
  func.func @transform_3(%arg0: i32) -> (i32, i32) {
    %c0_i32 = arith.constant 0 : i32
    %c0_i32_0 = arith.constant 0 : i32
    %c0_i32_1 = arith.constant 0 : i32
    return %c0_i32, %c0_i32_0 : i32, i32
  }
  func.func @transform_4(%arg0: i32) -> (i32, i32) {
    %c0_i32 = arith.constant 0 : i32
    %c0_i32_0 = arith.constant 0 : i32
    %c0_i32_1 = arith.constant 0 : i32
    return %c0_i32, %c0_i32_0 : i32, i32
  }
  func.func @transform_5(%arg0: i32) -> (i32, i32) {
    %c0_i32 = arith.constant 0 : i32
    %c0_i32_0 = arith.constant 0 : i32
    return %arg0, %c0_i32 : i32, i32
  }
}

</mosaic_0001>

<llo_original>
// kernel: _lambda_.1
$region0: #{_lambda_.1}
  #allocation0 [shape = 'u32[]', space=smem, size = 0x4, offset = 0x4, fixed_abs, tag = 'smem constant byte address 0x4 - core index']
  #allocation1 [shape = 'u32[144,128]{1,0:T(1,128)}', space=vmem, size = 0x12000, scoped, tag = 'internal scratch']
  %s0 = inlined_call_operand.hbm [shape: f32[16,8,32], index: 0, kind: input, shape index: {}]
  %s1 = inlined_call_operand.hbm [shape: f32[16,8,32], index: 1, kind: input, shape index: {}]
  %s2 = inlined_call_operand.hbm [shape: f32[16,8,32], index: 2, kind: input, shape index: {}]
  %s3 = inlined_call_operand.hbm [shape: f32[32,256], index: 3, kind: input, shape index: {}]
  %s4 = inlined_call_operand.vmem [shape: f32[1,256], index: 4, kind: input, shape index: {}]
  %s5 = inlined_call_operand.hbm [shape: f32[16,128], index: 5, kind: output, shape index: {}]
  %s6 = sld [smem:[#allocation0]]
  $region69: #{_lambda_.1} parent=0
    _
  %s8 = ssub.s32 1, %s6
  %s9 = scalar_select 0, %s8, %s6
  $region1: #{_lambda_.1} parent=0
    #allocation2 [shape = 'u8[65536]{0}', space=vmem, size = 0x10000, scoped, tag = 'input window, operand 0']
    #allocation3 [shape = 's32[2]{0}', space=sflag, size = 0x8, scoped, tag = 'scoped memory for _lambda_.1']
    #allocation4 [shape = 's32[2]{0}', space=sflag, size = 0x8, scoped, tag = 'scoped memory for _lambda_.1']
    #allocation5 [shape = 'u8[65536]{0}', space=vmem, size = 0x10000, scoped, tag = 'input window, operand 1']
    #allocation6 [shape = 's32[2]{0}', space=sflag, size = 0x8, scoped, tag = 'scoped memory for _lambda_.1']
    #allocation7 [shape = 'u8[65536]{0}', space=vmem, size = 0x10000, scoped, tag = 'input window, operand 2']
    #allocation8 [shape = 'u8[32768]{0}', space=vmem, size = 0x8000, scoped, tag = 'input window, operand 3, single buffered']
    #allocation9 [shape = 's32[1]{0}', space=sflag, size = 0x4, scoped, tag = 'scoped memory for _lambda_.1']
    #allocation10 [shape = 'u8[8192]{0}', space=vmem, size = 0x2000, scoped, tag = 'output window, operand 0']
    %10 = vsyncpa [#allocation3], 0
    %s11 = scalar_lea.sflag [#allocation3], 1
    %12 = vsyncpa %s11, 0
    %13 = vsyncpa [#allocation6], 0
    %s14 = scalar_lea.sflag [#allocation6], 1
    %15 = vsyncpa %s14, 0
    %16 = vsyncpa [#allocation9], 0
    %17 = vsyncpa [#allocation4], 0
    %s18 = scalar_lea.sflag [#allocation4], 1
    %19 = vsyncpa %s18, 0
    loop: start=0, step=1, limit=4
    $region2: #{_lambda_.1} parent=1 // loop_pre_header
      _
    $region3: #{_lambda_.1} parent=1 // loop_header
      %s21 = sphi 0, %s25
      %p22 = scmp.ge.s32.totalorder %s21, 4
      %s31 = sphi 0, %s33
      %s34 = sphi 0, %s31
      %s35 = sphi 0, %s34
      %s51 = sphi 0, %s35
      %s57 = sphi 0, %s59
      %s60 = sphi 0, %s57
      %s61 = sphi 0, %s60
      %s77 = sphi 0, %s61
      %s83 = sphi 0, %s85
      %s86 = sphi 0, %s83
      %s87 = sphi 0, %s86
      %s103 = sphi 0, %s87
      %s107 = sphi 0, %s107
      %s109 = sphi 0, %s107
      %s110 = sphi 0, %s109
      %s124 = sphi 0, %s110
      %s128 = sphi 0, %s128
      %s130 = sphi 0, %s128
      %s131 = sphi 0, %s130
      %s145 = sphi 0, %s131
      %s151 = sphi 0, %s153
      %s154 = sphi 0, %s151
      %s155 = sphi 0, %s154
      %s171 = sphi 0, %s155
    $region4: #{_lambda_.1} parent=1 // loop_header_branch
      %24 = sbr.rel (%p22) target = $region8
    $region5: #{_lambda_.1} parent=1 // loop_body
      %s26 = ssub.s32 %s21, 1
      %s27 = ssub.s32 %s21, 2
      %s28 = sadd.s32 %s21, 1
      %s29 = ssub.s32 %s21, %s28
      %p30 = scmp.eq.s32.totalorder %s29, 0
      %s32 = sadd.s32 %s31, 1
      %s33 = scalar_select %p30, %s31, %s32
      %p36 = pneg %p30
      %p37 = scmp.eq.s32.totalorder %s21, 1
      %p38 = por %p36, %p37
      %p39 = scmp.ne.s32.totalorder %s31, %s34
      %p40 = scmp.eq.s32.totalorder %s21, 0
      %p41 = por %p39, %p40
      %p42 = scmp.ne.s32.totalorder %s31, %s34
      %p43 = scmp.eq.s32.totalorder %s26, 1
      %p44 = por %p42, %p43
      %p45 = scmp.ne.s32.totalorder %s34, %s35
      %p46 = scmp.eq.s32.totalorder %s26, 0
      %p47 = por %p45, %p46
      %p48 = scmp.ne.s32.totalorder %s34, %s35
      %p49 = scmp.eq.s32.totalorder %s27, 1
      %p50 = por %p48, %p49
      %p52 = scmp.ne.s32.totalorder %s35, %s51
      %p53 = scmp.eq.s32.totalorder %s27, 0
      %p54 = por %p52, %p53
      %s55 = ssub.s32 %s21, %s28
      %p56 = scmp.eq.s32.totalorder %s55, 0
      %s58 = sadd.s32 %s57, 1
      %s59 = scalar_select %p56, %s57, %s58
      %p62 = pneg %p56
      %p63 = scmp.eq.s32.totalorder %s21, 1
      %p64 = por %p62, %p63
      %p65 = scmp.ne.s32.totalorder %s57, %s60
      %p66 = scmp.eq.s32.totalorder %s21, 0
      %p67 = por %p65, %p66
      %p68 = scmp.ne.s32.totalorder %s57, %s60
      %p69 = scmp.eq.s32.totalorder %s26, 1
      %p70 = por %p68, %p69
      %p71 = scmp.ne.s32.totalorder %s60, %s61
      %p72 = scmp.eq.s32.totalorder %s26, 0
      %p73 = por %p71, %p72
      %p74 = scmp.ne.s32.totalorder %s60, %s61
      %p75 = scmp.eq.s32.totalorder %s27, 1
      %p76 = por %p74, %p75
      %p78 = scmp.ne.s32.totalorder %s61, %s77
      %p79 = scmp.eq.s32.totalorder %s27, 0
      %p80 = por %p78, %p79
      %s81 = ssub.s32 %s21, %s28
      %p82 = scmp.eq.s32.totalorder %s81, 0
      %s84 = sadd.s32 %s83, 1
      %s85 = scalar_select %p82, %s83, %s84
      %p88 = pneg %p82
      %p89 = scmp.eq.s32.totalorder %s21, 1
      %p90 = por %p88, %p89
      %p91 = scmp.ne.s32.totalorder %s83, %s86
      %p92 = scmp.eq.s32.totalorder %s21, 0
      %p93 = por %p91, %p92
      %p94 = scmp.ne.s32.totalorder %s83, %s86
      %p95 = scmp.eq.s32.totalorder %s26, 1
      %p96 = por %p94, %p95
      %p97 = scmp.ne.s32.totalorder %s86, %s87
      %p98 = scmp.eq.s32.totalorder %s26, 0
      %p99 = por %p97, %p98
      %p100 = scmp.ne.s32.totalorder %s86, %s87
      %p101 = scmp.eq.s32.totalorder %s27, 1
      %p102 = por %p100, %p101
      %p104 = scmp.ne.s32.totalorder %s87, %s103
      %p105 = scmp.eq.s32.totalorder %s27, 0
      %p106 = por %p104, %p105
      %s108 = sadd.s32 %s107, 1
      %p111 = scmp.eq.s32.totalorder %s21, 1
      %p112 = scmp.ne.s32.totalorder %s107, %s109
      %p113 = scmp.eq.s32.totalorder %s21, 0
      %p114 = por %p112, %p113
      %p115 = scmp.ne.s32.totalorder %s107, %s109
      %p116 = scmp.eq.s32.totalorder %s26, 1
      %p117 = por %p115, %p116
      %p118 = scmp.ne.s32.totalorder %s109, %s110
      %p119 = scmp.eq.s32.totalorder %s26, 0
      %p120 = por %p118, %p119
      %p121 = scmp.ne.s32.totalorder %s109, %s110
      %p122 = scmp.eq.s32.totalorder %s27, 1
      %p123 = por %p121, %p122
      %p125 = scmp.ne.s32.totalorder %s110, %s124
      %p126 = scmp.eq.s32.totalorder %s27, 0
      %p127 = por %p125, %p126
      %s129 = sadd.s32 %s128, 1
      %p132 = scmp.eq.s32.totalorder %s21, 1
      %p133 = scmp.ne.s32.totalorder %s128, %s130
      %p134 = scmp.eq.s32.totalorder %s21, 0
      %p135 = por %p133, %p134
      %p136 = scmp.ne.s32.totalorder %s128, %s130
      %p137 = scmp.eq.s32.totalorder %s26, 1
      %p138 = por %p136, %p137
      %p139 = scmp.ne.s32.totalorder %s130, %s131
      %p140 = scmp.eq.s32.totalorder %s26, 0
      %p141 = por %p139, %p140
      %p142 = scmp.ne.s32.totalorder %s130, %s131
      %p143 = scmp.eq.s32.totalorder %s27, 1
      %p144 = por %p142, %p143
      %p146 = scmp.ne.s32.totalorder %s131, %s145
      %p147 = scmp.eq.s32.totalorder %s27, 0
      %p148 = por %p146, %p147
      %s149 = ssub.s32 %s21, %s28
      %p150 = scmp.eq.s32.totalorder %s149, 0
      %s152 = sadd.s32 %s151, 1
      %s153 = scalar_select %p150, %s151, %s152
      %p156 = pneg %p150
      %p157 = scmp.eq.s32.totalorder %s21, 1
      %p158 = por %p156, %p157
      %p159 = scmp.ne.s32.totalorder %s151, %s154
      %p160 = scmp.eq.s32.totalorder %s21, 0
      %p161 = por %p159, %p160
      %p162 = scmp.ne.s32.totalorder %s151, %s154
      %p163 = scmp.eq.s32.totalorder %s26, 1
      %p164 = por %p162, %p163
      %p165 = scmp.ne.s32.totalorder %s154, %s155
      %p166 = scmp.eq.s32.totalorder %s26, 0
      %p167 = por %p165, %p166
      %p168 = scmp.ne.s32.totalorder %s154, %s155
      %p169 = scmp.eq.s32.totalorder %s27, 1
      %p170 = por %p168, %p169
      %p172 = scmp.ne.s32.totalorder %s155, %s171
      %p173 = scmp.eq.s32.totalorder %s27, 0
      %p174 = por %p172, %p173
      %p175 = scmp.le.s32.totalorder 1, %s21
      %p176 = scmp.lt.s32.totalorder %s21, 3
      %p177 = pnand %p175, %p176
      %p178 = pneg %p177
      // Predicated region
      $region9: #{_lambda_.1} parent=5 // pred_check
        _
      $region10: #{_lambda_.1} parent=5 // pred_check_branch
        %180 = sbr.rel (%p177) target = $region12
      $region11: #{_lambda_.1} parent=5 // pred_region
        %s181 = ssub.s32 %s21, 1
        // Predicated region
        $region13: #{_lambda_.1} parent=11 // pred_check
          %p182 = pneg %p120
        $region14: #{_lambda_.1} parent=11 // pred_check_branch
          %184 = sbr.rel (%p182) target = $region16
        $region15: #{_lambda_.1} parent=11 // pred_region
          %s186 = ssub.s32 1024, 1024
          %187 = vsyncadd [#allocation9], %s186
          %s188 = sshll.u32 [#allocation8], 4
          %s189 = int_to_ptr.vmem [resolvable:$true] %s188
          %194 = dma.hbm_to_vmem [thread:$0]  %s3, 1024, %s189, [#allocation9], 256, 256, 16
        $region16: #{_lambda_.1} parent=11 // pred_fallthru
          _
        // Predicated region
        $region17: #{_lambda_.1} parent=11 // pred_check
          %p195 = pneg %p141
        $region18: #{_lambda_.1} parent=11 // pred_check_branch
          %197 = sbr.rel (%p195) target = $region20
        $region19: #{_lambda_.1} parent=11 // pred_region
          _
        $region20: #{_lambda_.1} parent=11 // pred_fallthru
          _
      $region12: #{_lambda_.1} parent=5 // pred_fallthru
        _
      %p198 = scmp.lt.s32.totalorder %s21, 2
      // Predicated region
      $region21: #{_lambda_.1} parent=5 // pred_check
        %p199 = pneg %p198
      $region22: #{_lambda_.1} parent=5 // pred_check_branch
        %201 = sbr.rel (%p199) target = $region24
      $region23: #{_lambda_.1} parent=5 // pred_region
        // Predicated region
        $region25: #{_lambda_.1} parent=23 // pred_check
          %p202 = pneg %p41
        $region26: #{_lambda_.1} parent=23 // pred_check_branch
          %204 = sbr.rel (%p202) target = $region28
        $region27: #{_lambda_.1} parent=23 // pred_region
          %s205 = sand.u32 %s31, 1
          %s206 = scalar_lea.sflag [#allocation3], %s205
          %s207 = sand.u32 %s31, 1
          %s208 = smul.addr %s207, 64
          %s209 = scalar_lea.vmem [#allocation2], %s208
          %s210 = smul.u32 8, %s21
          %s212 = ssub.s32 1024, 1024
          %213 = vsyncadd %s206, %s212
          %s214 = smul.addr %s210, 128
          %s215 = scalar_lea.hbm %s0, %s214
          %s216 = sshll.u32 %s209, 4
          %s217 = int_to_ptr.vmem [resolvable:$true] %s216
          %222 = dma.hbm_to_vmem [thread:$0]  %s215, 1024, %s217, %s206, 128, 128, 8
        $region28: #{_lambda_.1} parent=23 // pred_fallthru
          _
        // Predicated region
        $region29: #{_lambda_.1} parent=23 // pred_check
          %p223 = pneg %p67
        $region30: #{_lambda_.1} parent=23 // pred_check_branch
          %225 = sbr.rel (%p223) target = $region32
        $region31: #{_lambda_.1} parent=23 // pred_region
          %s226 = sand.u32 %s21, 1
          %s227 = scalar_lea.sflag [#allocation6], %s226
          %s228 = sand.u32 %s57, 1
          %s229 = smul.addr %s228, 64
          %s230 = scalar_lea.vmem [#allocation5], %s229
          %s231 = smul.u32 8, %s21
          %s233 = ssub.s32 1024, 1024
          %234 = vsyncadd %s227, %s233
          %s235 = smul.addr %s231, 128
          %s236 = scalar_lea.hbm %s1, %s235
          %s237 = sshll.u32 %s230, 4
          %s238 = int_to_ptr.vmem [resolvable:$true] %s237
          %243 = dma.hbm_to_vmem [thread:$0]  %s236, 1024, %s238, %s227, 128, 128, 8
        $region32: #{_lambda_.1} parent=23 // pred_fallthru
          _
        // Predicated region
        $region33: #{_lambda_.1} parent=23 // pred_check
          %p244 = pneg %p93
        $region34: #{_lambda_.1} parent=23 // pred_check_branch
          %246 = sbr.rel (%p244) target = $region36
        $region35: #{_lambda_.1} parent=23 // pred_region
          %s247 = sand.u32 %s21, 1
          %s248 = scalar_lea.sflag [#allocation6], %s247
          %s249 = sand.u32 %s83, 1
          %s250 = smul.addr %s249, 64
          %s251 = scalar_lea.vmem [#allocation7], %s250
          %s252 = smul.u32 8, %s21
          %s254 = ssub.s32 1024, 1024
          %255 = vsyncadd %s248, %s254
          %s256 = smul.addr %s252, 128
          %s257 = scalar_lea.hbm %s2, %s256
          %s258 = sshll.u32 %s251, 4
          %s259 = int_to_ptr.vmem [resolvable:$true] %s258
          %264 = dma.hbm_to_vmem [thread:$0]  %s257, 1024, %s259, %s248, 128, 128, 8
        $region36: #{_lambda_.1} parent=23 // pred_fallthru
          _
      $region24: #{_lambda_.1} parent=5 // pred_fallthru
        _
      %p265 = scmp.le.s32.totalorder 1, %s21
      %p266 = scmp.lt.s32.totalorder %s21, 3
      %p267 = pnand %p265, %p266
      %p268 = pneg %p267
      // Predicated region
      $region37: #{_lambda_.1} parent=5 // pred_check
        _
      $region38: #{_lambda_.1} parent=5 // pred_check_branch
        %270 = sbr.rel (%p267) target = $region40
      $region39: #{_lambda_.1} parent=5 // pred_region
        %s271 = ssub.s32 %s21, 1
        %s272 = sand.u32 %s34, 1
        %s273 = scalar_lea.sflag [#allocation3], %s272
        %s274 = sand.u32 %s34, 1
        %s275 = smul.addr %s274, 64
        %s276 = scalar_lea.vmem [#allocation2], %s275
        // Predicated region
        $region41: #{_lambda_.1} parent=39 // pred_check
          %p277 = pneg %p47
        $region42: #{_lambda_.1} parent=39 // pred_check_branch
          %279 = sbr.rel (%p277) target = $region44
        $region43: #{_lambda_.1} parent=39 // pred_region
          %280 = dma.done %s273, 1024
        $region44: #{_lambda_.1} parent=39 // pred_fallthru
          _
        %s281 = sand.u32 %s26, 1
        %s282 = scalar_lea.sflag [#allocation6], %s281
        %s283 = sand.u32 %s60, 1
        %s284 = smul.addr %s283, 64
        %s285 = scalar_lea.vmem [#allocation5], %s284
        // Predicated region
        $region45: #{_lambda_.1} parent=39 // pred_check
          %p286 = pneg %p73
        $region46: #{_lambda_.1} parent=39 // pred_check_branch
          %288 = sbr.rel (%p286) target = $region48
        $region47: #{_lambda_.1} parent=39 // pred_region
          %289 = dma.done %s282, 1024
        $region48: #{_lambda_.1} parent=39 // pred_fallthru
          _
        %s290 = sand.u32 %s26, 1
        %s291 = scalar_lea.sflag [#allocation6], %s290
        %s292 = sand.u32 %s86, 1
        %s293 = smul.addr %s292, 64
        %s294 = scalar_lea.vmem [#allocation7], %s293
        // Predicated region
        $region49: #{_lambda_.1} parent=39 // pred_check
          %p295 = pneg %p99
        $region50: #{_lambda_.1} parent=39 // pred_check_branch
          %297 = sbr.rel (%p295) target = $region52
        $region51: #{_lambda_.1} parent=39 // pred_region
          %298 = dma.done %s291, 1024
        $region52: #{_lambda_.1} parent=39 // pred_fallthru
          _
        // Predicated region
        $region53: #{_lambda_.1} parent=39 // pred_check
          %p299 = pneg %p120
        $region54: #{_lambda_.1} parent=39 // pred_check_branch
          %301 = sbr.rel (%p299) target = $region56
        $region55: #{_lambda_.1} parent=39 // pred_region
          %302 = dma.done [#allocation9], 1024
        $region56: #{_lambda_.1} parent=39 // pred_fallthru
          _
        %s303 = sand.u32 %s34, 1
        %s304 = scalar_lea.sflag [#allocation3], %s303
        %s305 = sand.u32 %s34, 1
        %s306 = smul.addr %s305, 64
        %s307 = scalar_lea.vmem [#allocation2], %s306
        %p308 = pneg %p47
        %p309 = pneg %p44
        %s310 = sand.u32 %s26, 1
        %s311 = scalar_lea.sflag [#allocation6], %s310
        %s312 = sand.u32 %s60, 1
        %s313 = smul.addr %s312, 64
        %s314 = scalar_lea.vmem [#allocation5], %s313
        %p315 = pneg %p73
        %p316 = pneg %p70
        %s317 = sand.u32 %s26, 1
        %s318 = scalar_lea.sflag [#allocation6], %s317
        %s319 = sand.u32 %s86, 1
        %s320 = smul.addr %s319, 64
        %s321 = scalar_lea.vmem [#allocation7], %s320
        %p322 = pneg %p99
        %p323 = pneg %p96
        %p324 = pneg %p120
        %p325 = pneg %p117
        %p326 = pneg %p141
        %p327 = pneg %p138
        %p328 = pneg %p167
        %p329 = pneg %p164
        %s330 = sand.u32 %s154, 1
        %s331 = scalar_lea.sflag [#allocation4], %s330
        %s332 = sand.u32 %s154, 1
        %s333 = smul.addr %s332, 8
        %s334 = scalar_lea.vmem [#allocation10], %s333
        %s335 = smul.u32 8, %s26
        %s336 = smul.u32 8, %s26
        %s337 = smul.u32 8, %s26
        %v338 = vld [vmem:[%s276] sm:$0xff]
        %v339 = vld [vmem:[%s276 + $0x8] sm:$0xff]
        %v340 = vld [vmem:[%s276 + $0x10] sm:$0xff]
        %v341 = vld [vmem:[%s276 + $0x18] sm:$0xff]
        %v342 = vld [vmem:[%s276 + $0x20] sm:$0xff]
        %v343 = vld [vmem:[%s276 + $0x28] sm:$0xff]
        %v344 = vld [vmem:[%s276 + $0x30] sm:$0xff]
        %v345 = vld [vmem:[%s276 + $0x38] sm:$0xff]
        %v346 = vld [vmem:[%s285] sm:$0xff]
        %v347 = vld [vmem:[%s285 + $0x8] sm:$0xff]
        %v348 = vld [vmem:[%s285 + $0x10] sm:$0xff]
        %v349 = vld [vmem:[%s285 + $0x18] sm:$0xff]
        %v350 = vld [vmem:[%s285 + $0x20] sm:$0xff]
        %v351 = vld [vmem:[%s285 + $0x28] sm:$0xff]
        %v352 = vld [vmem:[%s285 + $0x30] sm:$0xff]
        %v353 = vld [vmem:[%s285 + $0x38] sm:$0xff]
        %v354 = vld [vmem:[%s294] sm:$0xff]
        %v355 = vld [vmem:[%s294 + $0x8] sm:$0xff]
        %v356 = vld [vmem:[%s294 + $0x10] sm:$0xff]
        %v357 = vld [vmem:[%s294 + $0x18] sm:$0xff]
        %v358 = vld [vmem:[%s294 + $0x20] sm:$0xff]
        %v359 = vld [vmem:[%s294 + $0x28] sm:$0xff]
        %v360 = vld [vmem:[%s294 + $0x30] sm:$0xff]
        %v361 = vld [vmem:[%s294 + $0x38] sm:$0xff]
        %v362 = vld [vmem:[#allocation8] sm:$0xff]
        %v363 = vld [vmem:[#allocation8 + $0x8] sm:$0xff]
        %v364 = vld [vmem:[#allocation8 + $0x10] sm:$0xff]
        %v365 = vld [vmem:[#allocation8 + $0x18] sm:$0xff]
        %v366 = vld [vmem:[#allocation8 + $0x20] sm:$0xff]
        %v367 = vld [vmem:[#allocation8 + $0x28] sm:$0xff]
        %v368 = vld [vmem:[#allocation8 + $0x30] sm:$0xff]
        %v369 = vld [vmem:[#allocation8 + $0x38] sm:$0xff]
        %v370 = vld [vmem:[%s4] sm:$0x3]
        %v372 = vlaneseq
        %v373 = vshrl.u32 %v372, 7
        %v374 = vsub.s32 0, %v373
        %v375 = vrot.slane %v370, %v374
        %v376 = vlaneseq
        %v377 = vshrl.u32 %v376, 7
        %v378 = vsub.s32 1, %v377
        %v379 = vrot.slane %v370, %v378
        %vm382 = vcmask 261120
        %v384 = vsel %vm382, %v338, 0
        %v387 = vsel %vm382, %v346, 0
        %v390 = vsel %vm382, %v354, 0
        %v393 = vsel %vm382, %v339, 0
        %v396 = vsel %vm382, %v347, 0
        %v399 = vsel %vm382, %v355, 0
        %v402 = vsel %vm382, %v340, 0
        %v405 = vsel %vm382, %v348, 0
        %v408 = vsel %vm382, %v356, 0
        %v411 = vsel %vm382, %v341, 0
        %v414 = vsel %vm382, %v349, 0
        %v417 = vsel %vm382, %v357, 0
        %v420 = vsel %vm382, %v342, 0
        %v423 = vsel %vm382, %v350, 0
        %v426 = vsel %vm382, %v358, 0
        %v429 = vsel %vm382, %v343, 0
        %v432 = vsel %vm382, %v351, 0
        %v435 = vsel %vm382, %v359, 0
        %v438 = vsel %vm382, %v344, 0
        %v441 = vsel %vm382, %v352, 0
        %v444 = vsel %vm382, %v360, 0
        %v447 = vsel %vm382, %v345, 0
        %v450 = vsel %vm382, %v353, 0
        %v453 = vsel %vm382, %v361, 0
        %455 = vmatprep.subr.mxu0 %v363
        %456 = vmatpush1.msra.mxu0 %v362
        %457 = vmatprep.subr.mxu0 %v365
        %458 = vmatpush1.msra.mxu0 %v364
        %459 = vmatprep.subr.mxu0 %v367
        %460 = vmatpush1.msra.mxu0 %v366
        %461 = vmatprep.subr.mxu0 %v369
        %462 = vmatpush1.msra.mxu0 %v368
        %463 = vmatprep.subr.mxu0 0.0
        %464 = vmatpush1.msra.mxu0 0.0
        %465 = vmatprep.subr.mxu0 0.0
        %466 = vmatpush1.msra.mxu0 0.0
        %467 = vmatprep.subr.mxu0 0.0
        %468 = vmatpush1.msra.mxu0 0.0
        %469 = vmatprep.subr.mxu0 0.0
        %470 = vmatpush1.msra.mxu0 0.0
        %471 = vmatprep.subr.mxu0 0.0
        %472 = vmatpush1.msra.mxu0 0.0
        %473 = vmatprep.subr.mxu0 0.0
        %474 = vmatpush1.msra.mxu0 0.0
        %475 = vmatprep.subr.mxu0 0.0
        %476 = vmatpush1.msra.mxu0 0.0
        %477 = vmatprep.subr.mxu0 0.0
        %478 = vmatpush1.msra.mxu0 0.0
        %479 = vmatprep.subr.mxu0 0.0
        %480 = vmatpush1.msra.mxu0 0.0
        %481 = vmatprep.subr.mxu0 0.0
        %482 = vmatpush1.msra.mxu0 0.0
        %483 = vmatprep.subr.mxu0 0.0
        %484 = vmatpush1.msra.mxu0 0.0
        %485 = vmatprep.subr.mxu0 0.0
        %486 = vmatpush1.msra.mxu0 0.0
        %487 = vmatprep.subr.mxu0 0.0
        %488 = vmatpush1.msra.mxu0 0.0
        %489 = vmatprep.subr.mxu0 0.0
        %490 = vmatpush1.msra.mxu0 0.0
        %491 = vmatprep.subr.mxu0 0.0
        %492 = vmatpush1.msra.mxu0 0.0
        %493 = vmatprep.subr.mxu0 0.0
        %494 = vmatpush1.msra.mxu0 0.0
        %495 = vmatprep.subr.mxu0 0.0
        %496 = vmatpush1.msra.mxu0 0.0
        %497 = vmatprep.subr.mxu0 0.0
        %498 = vmatpush1.msra.mxu0 0.0
        %499 = vmatprep.subr.mxu0 0.0
        %500 = vmatpush1.msra.mxu0 0.0
        %501 = vmatprep.subr.mxu0 0.0
        %502 = vmatpush1.msra.mxu0 0.0
        %503 = vmatprep.subr.mxu0 0.0
        %504 = vmatpush1.msra.mxu0 0.0
        %505 = vmatprep.subr.mxu0 0.0
        %506 = vmatpush1.msra.mxu0 0.0
        %507 = vmatprep.subr.mxu0 0.0
        %508 = vmatpush1.msra.mxu0 0.0
        %509 = vmatprep.subr.mxu0 0.0
        %510 = vmatpush1.msra.mxu0 0.0
        %511 = vmatprep.subr.mxu0 0.0
        %512 = vmatpush1.msra.mxu0 0.0
        %513 = vmatprep.subr.mxu0 0.0
        %514 = vmatpush1.msra.mxu0 0.0
        %515 = vmatprep.subr.mxu0 0.0
        %516 = vmatpush1.msra.mxu0 0.0
        %517 = vmatprep.subr.mxu0 0.0
        %518 = vmatpush1.msra.mxu0 0.0
        %519 = vmatprep.mubr.f32.mxu0 0.0
        %520 = vmatmul.mubr.f32.gmra.mrb[0].mxu0 %v384
        %v521 = vpop.f32.mrb[0].mxu0
        %v522 = vadd.f32 %v375, %v521
        %v523 = vpop.f32.mrb[0].mxu0
        %v524 = vadd.f32 %v379, %v523
        %525 = vmatprep.mubr.f32.mxu0 0.0
        %526 = vmatmul.mubr.f32.gmra.mrb[0].mxu0 %v387
        %v527 = vpop.f32.mrb[0].mxu0
        %v528 = vadd.f32 %v375, %v527
        %v529 = vpop.f32.mrb[0].mxu0
        %v530 = vadd.f32 %v379, %v529
        %531 = vmatprep.mubr.f32.mxu0 0.0
        %532 = vmatmul.mubr.f32.gmra.mrb[0].mxu0 %v390
        %v533 = vpop.f32.mrb[0].mxu0
        %v534 = vadd.f32 %v375, %v533
        %v535 = vpop.f32.mrb[0].mxu0
        %v536 = vadd.f32 %v379, %v535
        %537 = vmatprep.mubr.f32.mxu0 0.0
        %538 = vmatmul.mubr.f32.gmra.mrb[0].mxu0 %v393
        %v539 = vpop.f32.mrb[0].mxu0
        %v540 = vadd.f32 %v375, %v539
        %v541 = vpop.f32.mrb[0].mxu0
        %v542 = vadd.f32 %v379, %v541
        %543 = vmatprep.mubr.f32.mxu0 0.0
        %544 = vmatmul.mubr.f32.gmra.mrb[0].mxu0 %v396
        %v545 = vpop.f32.mrb[0].mxu0
        %v546 = vadd.f32 %v375, %v545
        %v547 = vpop.f32.mrb[0].mxu0
        %v548 = vadd.f32 %v379, %v547
        %549 = vmatprep.mubr.f32.mxu0 0.0
        %550 = vmatmul.mubr.f32.gmra.mrb[0].mxu0 %v399
        %v551 = vpop.f32.mrb[0].mxu0
        %v552 = vadd.f32 %v375, %v551
        %v553 = vpop.f32.mrb[0].mxu0
        %v554 = vadd.f32 %v379, %v553
        %555 = vmatprep.mubr.f32.mxu0 0.0
        %556 = vmatmul.mubr.f32.gmra.mrb[0].mxu0 %v402
        %v557 = vpop.f32.mrb[0].mxu0
        %v558 = vadd.f32 %v375, %v557
        %v559 = vpop.f32.mrb[0].mxu0
        %v560 = vadd.f32 %v379, %v559
        %561 = vmatprep.mubr.f32.mxu0 0.0
        %562 = vmatmul.mubr.f32.gmra.mrb[0].mxu0 %v405
        %v563 = vpop.f32.mrb[0].mxu0
        %v564 = vadd.f32 %v375, %v563
        %v565 = vpop.f32.mrb[0].mxu0
        %v566 = vadd.f32 %v379, %v565
        %567 = vmatprep.mubr.f32.mxu0 0.0
        %568 = vmatmul.mubr.f32.gmra.mrb[0].mxu0 %v408
        %v569 = vpop.f32.mrb[0].mxu0
        %v570 = vadd.f32 %v375, %v569
        %v571 = vpop.f32.mrb[0].mxu0
        %v572 = vadd.f32 %v379, %v571
        %573 = vmatprep.mubr.f32.mxu0 0.0
        %574 = vmatmul.mubr.f32.gmra.mrb[0].mxu0 %v411
        %v575 = vpop.f32.mrb[0].mxu0
        %v576 = vadd.f32 %v375, %v575
        %v577 = vpop.f32.mrb[0].mxu0
        %v578 = vadd.f32 %v379, %v577
        %579 = vmatprep.mubr.f32.mxu0 0.0
        %580 = vmatmul.mubr.f32.gmra.mrb[0].mxu0 %v414
        %v581 = vpop.f32.mrb[0].mxu0
        %v582 = vadd.f32 %v375, %v581
        %v583 = vpop.f32.mrb[0].mxu0
        %v584 = vadd.f32 %v379, %v583
        %585 = vmatprep.mubr.f32.mxu0 0.0
        %586 = vmatmul.mubr.f32.gmra.mrb[0].mxu0 %v417
        %v587 = vpop.f32.mrb[0].mxu0
        %v588 = vadd.f32 %v375, %v587
        %v589 = vpop.f32.mrb[0].mxu0
        %v590 = vadd.f32 %v379, %v589
        %591 = vmatprep.mubr.f32.mxu0 0.0
        %592 = vmatmul.mubr.f32.gmra.mrb[0].mxu0 %v420
        %v593 = vpop.f32.mrb[0].mxu0
        %v594 = vadd.f32 %v375, %v593
        %v595 = vpop.f32.mrb[0].mxu0
        %v596 = vadd.f32 %v379, %v595
        %597 = vmatprep.mubr.f32.mxu0 0.0
        %598 = vmatmul.mubr.f32.gmra.mrb[0].mxu0 %v423
        %v599 = vpop.f32.mrb[0].mxu0
        %v600 = vadd.f32 %v375, %v599
        %v601 = vpop.f32.mrb[0].mxu0
        %v602 = vadd.f32 %v379, %v601
        %603 = vmatprep.mubr.f32.mxu0 0.0
        %604 = vmatmul.mubr.f32.gmra.mrb[0].mxu0 %v426
        %v605 = vpop.f32.mrb[0].mxu0
        %v606 = vadd.f32 %v375, %v605
        %v607 = vpop.f32.mrb[0].mxu0
        %v608 = vadd.f32 %v379, %v607
        %609 = vmatprep.mubr.f32.mxu0 0.0
        %610 = vmatmul.mubr.f32.gmra.mrb[0].mxu0 %v429
        %v611 = vpop.f32.mrb[0].mxu0
        %v612 = vadd.f32 %v375, %v611
        %v613 = vpop.f32.mrb[0].mxu0
        %v614 = vadd.f32 %v379, %v613
        %615 = vmatprep.mubr.f32.mxu0 0.0
        %616 = vmatmul.mubr.f32.gmra.mrb[0].mxu0 %v432
        %v617 = vpop.f32.mrb[0].mxu0
        %v618 = vadd.f32 %v375, %v617
        %v619 = vpop.f32.mrb[0].mxu0
        %v620 = vadd.f32 %v379, %v619
        %621 = vmatprep.mubr.f32.mxu0 0.0
        %622 = vmatmul.mubr.f32.gmra.mrb[0].mxu0 %v435
        %v623 = vpop.f32.mrb[0].mxu0
        %v624 = vadd.f32 %v375, %v623
        %v625 = vpop.f32.mrb[0].mxu0
        %v626 = vadd.f32 %v379, %v625
        %627 = vmatprep.mubr.f32.mxu0 0.0
        %628 = vmatmul.mubr.f32.gmra.mrb[0].mxu0 %v438
        %v629 = vpop.f32.mrb[0].mxu0
        %v630 = vadd.f32 %v375, %v629
        %v631 = vpop.f32.mrb[0].mxu0
        %v632 = vadd.f32 %v379, %v631
        %633 = vmatprep.mubr.f32.mxu0 0.0
        %634 = vmatmul.mubr.f32.gmra.mrb[0].mxu0 %v441
        %v635 = vpop.f32.mrb[0].mxu0
        %v636 = vadd.f32 %v375, %v635
        %v637 = vpop.f32.mrb[0].mxu0
        %v638 = vadd.f32 %v379, %v637
        %639 = vmatprep.mubr.f32.mxu0 0.0
        %640 = vmatmul.mubr.f32.gmra.mrb[0].mxu0 %v444
        %v641 = vpop.f32.mrb[0].mxu0
        %v642 = vadd.f32 %v375, %v641
        %v643 = vpop.f32.mrb[0].mxu0
        %v644 = vadd.f32 %v379, %v643
        %645 = vmatprep.mubr.f32.mxu0 0.0
        %646 = vmatmul.mubr.f32.gmra.mrb[0].mxu0 %v447
        %v647 = vpop.f32.mrb[0].mxu0
        %v648 = vadd.f32 %v375, %v647
        %v649 = vpop.f32.mrb[0].mxu0
        %v650 = vadd.f32 %v379, %v649
        %651 = vmatprep.mubr.f32.mxu0 0.0
        %652 = vmatmul.mubr.f32.gmra.mrb[0].mxu0 %v450
        %v653 = vpop.f32.mrb[0].mxu0
        %v654 = vadd.f32 %v375, %v653
        %v655 = vpop.f32.mrb[0].mxu0
        %v656 = vadd.f32 %v379, %v655
        %657 = vmatprep.mubr.f32.mxu0 0.0
        %658 = vmatmul.mubr.f32.gmra.mrb[0].mxu0 %v453
        %v659 = vpop.f32.mrb[0].mxu0
        %v660 = vadd.f32 %v375, %v659
        %v661 = vpop.f32.mrb[0].mxu0
        %v662 = vadd.f32 %v379, %v661
        %663 = vdwg.mxu0
        %v664 = vsel %vm382, %v354, 0.0
        %v665 = vrot.slane %v664, 4
        %v666 = vadd.f32 %v664, %v665
        %v667 = vrot.slane %v666, 2
        %v668 = vadd.f32 %v666, %v667
        %v669 = vrot.slane %v668, 1
        %v670 = vadd.f32 %v668, %v669
        %v671 = vsel %vm382, %v355, 0.0
        %v672 = vrot.slane %v671, 4
        %v673 = vadd.f32 %v671, %v672
        %v674 = vrot.slane %v673, 2
        %v675 = vadd.f32 %v673, %v674
        %v676 = vrot.slane %v675, 1
        %v677 = vadd.f32 %v675, %v676
        %v678 = vsel %vm382, %v356, 0.0
        %v679 = vrot.slane %v678, 4
        %v680 = vadd.f32 %v678, %v679
        %v681 = vrot.slane %v680, 2
        %v682 = vadd.f32 %v680, %v681
        %v683 = vrot.slane %v682, 1
        %v684 = vadd.f32 %v682, %v683
        %v685 = vsel %vm382, %v357, 0.0
        %v686 = vrot.slane %v685, 4
        %v687 = vadd.f32 %v685, %v686
        %v688 = vrot.slane %v687, 2
        %v689 = vadd.f32 %v687, %v688
        %v690 = vrot.slane %v689, 1
        %v691 = vadd.f32 %v689, %v690
        %v692 = vsel %vm382, %v358, 0.0
        %v693 = vrot.slane %v692, 4
        %v694 = vadd.f32 %v692, %v693
        %v695 = vrot.slane %v694, 2
        %v696 = vadd.f32 %v694, %v695
        %v697 = vrot.slane %v696, 1
        %v698 = vadd.f32 %v696, %v697
        %v699 = vsel %vm382, %v359, 0.0
        %v700 = vrot.slane %v699, 4
        %v701 = vadd.f32 %v699, %v700
        %v702 = vrot.slane %v701, 2
        %v703 = vadd.f32 %v701, %v702
        %v704 = vrot.slane %v703, 1
        %v705 = vadd.f32 %v703, %v704
        %v706 = vsel %vm382, %v360, 0.0
        %v707 = vrot.slane %v706, 4
        %v708 = vadd.f32 %v706, %v707
        %v709 = vrot.slane %v708, 2
        %v710 = vadd.f32 %v708, %v709
        %v711 = vrot.slane %v710, 1
        %v712 = vadd.f32 %v710, %v711
        %v713 = vsel %vm382, %v361, 0.0
        %v714 = vrot.slane %v713, 4
        %v715 = vadd.f32 %v713, %v714
        %v716 = vrot.slane %v715, 2
        %v717 = vadd.f32 %v715, %v716
        %v718 = vrot.slane %v717, 1
        %v719 = vadd.f32 %v717, %v718
        %v720 = vrcp.pop 8.0
        %v721 = vmul.f32 %v670, %v720
        %v722 = vmul.f32 %v677, %v720
        %v723 = vmul.f32 %v684, %v720
        %v724 = vmul.f32 %v691, %v720
        %v725 = vmul.f32 %v698, %v720
        %v726 = vmul.f32 %v705, %v720
        %v727 = vmul.f32 %v712, %v720
        %v728 = vmul.f32 %v719, %v720
        %737 = vrot.lane.b32.xlu0 %v721, 32
        %v738 = vpop.permute.xlu0 %737
        %739 = vrot.lane.b32.xlu0 %v722, 32
        %v740 = vpop.permute.xlu0 %739
        %741 = vrot.lane.b32.xlu0 %v723, 32
        %v742 = vpop.permute.xlu0 %741
        %743 = vrot.lane.b32.xlu0 %v724, 32
        %v744 = vpop.permute.xlu0 %743
        %745 = vrot.lane.b32.xlu0 %v725, 32
        %v746 = vpop.permute.xlu0 %745
        %747 = vrot.lane.b32.xlu0 %v726, 32
        %v748 = vpop.permute.xlu0 %747
        %749 = vrot.lane.b32.xlu0 %v727, 32
        %v750 = vpop.permute.xlu0 %749
        %751 = vrot.lane.b32.xlu0 %v728, 32
        %v752 = vpop.permute.xlu0 %751
        %v761 = vsel %vm382, 0.0, %v738
        %v762 = vsel %vm382, 0.0, %v740
        %v763 = vsel %vm382, 0.0, %v742
        %v764 = vsel %vm382, 0.0, %v744
        %v765 = vsel %vm382, 0.0, %v746
        %v766 = vsel %vm382, 0.0, %v748
        %v767 = vsel %vm382, 0.0, %v750
        %v768 = vsel %vm382, 0.0, %v752
        %vm769 = vcmask 523264
        %v770 = vsel %vm769, %v761, 0.0
        %v771 = vsel %vm769, %v762, 0.0
        %v772 = vsel %vm769, %v763, 0.0
        %v773 = vsel %vm769, %v764, 0.0
        %v774 = vsel %vm769, %v765, 0.0
        %v775 = vsel %vm769, %v766, 0.0
        %v776 = vsel %vm769, %v767, 0.0
        %v777 = vsel %vm769, %v768, 0.0
        %v778 = vlaneseq
        %v779 = vshrl.u32 %v778, 7
        %v780 = vsub.s32 0, %v779
        %v781 = vrot.slane %v770, %v780
        %v782 = vlaneseq
        %v783 = vshrl.u32 %v782, 7
        %v784 = vsub.s32 0, %v783
        %v785 = vlaneseq
        %v786 = vshrl.u32 %v785, 7
        %v787 = vsub.s32 0, %v786
        %v788 = vrot.slane %v771, %v787
        %v789 = vlaneseq
        %v790 = vshrl.u32 %v789, 7
        %v791 = vsub.s32 0, %v790
        %v792 = vrot.slane %v772, %v791
        %v793 = vlaneseq
        %v794 = vshrl.u32 %v793, 7
        %v795 = vsub.s32 0, %v794
        %v796 = vrot.slane %v773, %v795
        %v797 = vlaneseq
        %v798 = vshrl.u32 %v797, 7
        %v799 = vsub.s32 0, %v798
        %v800 = vrot.slane %v774, %v799
        %v801 = vlaneseq
        %v802 = vshrl.u32 %v801, 7
        %v803 = vsub.s32 0, %v802
        %v804 = vrot.slane %v775, %v803
        %v805 = vlaneseq
        %v806 = vshrl.u32 %v805, 7
        %v807 = vsub.s32 0, %v806
        %v808 = vrot.slane %v776, %v807
        %v809 = vlaneseq
        %v810 = vshrl.u32 %v809, 7
        %v811 = vsub.s32 0, %v810
        %v812 = vrot.slane %v777, %v811
        %v813 = vmul.f32 %v522, %v781
        %v814 = vmul.f32 %v524, 0.0
        %v815 = vmul.f32 %v540, %v788
        %v816 = vmul.f32 %v542, 0.0
        %v817 = vmul.f32 %v558, %v792
        %v818 = vmul.f32 %v560, 0.0
        %v819 = vmul.f32 %v576, %v796
        %v820 = vmul.f32 %v578, 0.0
        %v821 = vmul.f32 %v594, %v800
        %v822 = vmul.f32 %v596, 0.0
        %v823 = vmul.f32 %v612, %v804
        %v824 = vmul.f32 %v614, 0.0
        %v825 = vmul.f32 %v630, %v808
        %v826 = vmul.f32 %v632, 0.0
        %v827 = vmul.f32 %v648, %v812
        %v828 = vmul.f32 %v650, 0.0
        %v829 = vadd.f32 %v813, %v814
        %830 = vadd.xlane.f32.xlu0 %v829
        %v831 = vpop.xlane.xlu0 %830
        %v832 = vadd.f32 %v815, %v816
        %833 = vadd.xlane.f32.xlu0 %v832
        %v834 = vpop.xlane.xlu0 %833
        %v835 = vadd.f32 %v817, %v818
        %836 = vadd.xlane.f32.xlu0 %v835
        %v837 = vpop.xlane.xlu0 %836
        %v838 = vadd.f32 %v819, %v820
        %839 = vadd.xlane.f32.xlu0 %v838
        %v840 = vpop.xlane.xlu0 %839
        %v841 = vadd.f32 %v821, %v822
        %842 = vadd.xlane.f32.xlu0 %v841
        %v843 = vpop.xlane.xlu0 %842
        %v844 = vadd.f32 %v823, %v824
        %845 = vadd.xlane.f32.xlu0 %v844
        %v846 = vpop.xlane.xlu0 %845
        %v847 = vadd.f32 %v825, %v826
        %848 = vadd.xlane.f32.xlu0 %v847
        %v849 = vpop.xlane.xlu0 %848
        %v850 = vadd.f32 %v827, %v828
        %851 = vadd.xlane.f32.xlu0 %v850
        %v852 = vpop.xlane.xlu0 %851
        %v853 = vtanh.pop %v831
        %v854 = vtanh.pop %v834
        %v855 = vtanh.pop %v837
        %v856 = vtanh.pop %v840
        %v857 = vtanh.pop %v843
        %v858 = vtanh.pop %v846
        %v859 = vtanh.pop %v849
        %v860 = vtanh.pop %v852
        %v861 = vrot.slane %v853, 4
        %v862 = vmax.f32 %v853, %v861
        %v863 = vrot.slane %v862, 2
        %v864 = vmax.f32 %v862, %v863
        %v865 = vrot.slane %v864, 1
        %v866 = vmax.f32 %v864, %v865
        %v867 = vrot.slane %v854, 4
        %v868 = vmax.f32 %v854, %v867
        %v869 = vrot.slane %v868, 2
        %v870 = vmax.f32 %v868, %v869
        %v871 = vrot.slane %v870, 1
        %v872 = vmax.f32 %v870, %v871
        %v873 = vrot.slane %v855, 4
        %v874 = vmax.f32 %v855, %v873
        %v875 = vrot.slane %v874, 2
        %v876 = vmax.f32 %v874, %v875
        %v877 = vrot.slane %v876, 1
        %v878 = vmax.f32 %v876, %v877
        %v879 = vrot.slane %v856, 4
        %v880 = vmax.f32 %v856, %v879
        %v881 = vrot.slane %v880, 2
        %v882 = vmax.f32 %v880, %v881
        %v883 = vrot.slane %v882, 1
        %v884 = vmax.f32 %v882, %v883
        %v885 = vrot.slane %v857, 4
        %v886 = vmax.f32 %v857, %v885
        %v887 = vrot.slane %v886, 2
        %v888 = vmax.f32 %v886, %v887
        %v889 = vrot.slane %v888, 1
        %v890 = vmax.f32 %v888, %v889
        %v891 = vrot.slane %v858, 4
        %v892 = vmax.f32 %v858, %v891
        %v893 = vrot.slane %v892, 2
        %v894 = vmax.f32 %v892, %v893
        %v895 = vrot.slane %v894, 1
        %v896 = vmax.f32 %v894, %v895
        %v897 = vrot.slane %v859, 4
        %v898 = vmax.f32 %v859, %v897
        %v899 = vrot.slane %v898, 2
        %v900 = vmax.f32 %v898, %v899
        %v901 = vrot.slane %v900, 1
        %v902 = vmax.f32 %v900, %v901
        %v903 = vrot.slane %v860, 4
        %v904 = vmax.f32 %v860, %v903
        %v905 = vrot.slane %v904, 2
        %v906 = vmax.f32 %v904, %v905
        %v907 = vrot.slane %v906, 1
        %v908 = vmax.f32 %v906, %v907
        %v909 = vsub.f32 %v853, %v866
        %v910 = vsub.f32 %v854, %v872
        %v911 = vsub.f32 %v855, %v878
        %v912 = vsub.f32 %v856, %v884
        %v913 = vsub.f32 %v857, %v890
        %v914 = vsub.f32 %v858, %v896
        %v915 = vsub.f32 %v859, %v902
        %v916 = vsub.f32 %v860, %v908
        %v917 = vmul.f32 %v909, 1.442695
        %v918 = vpow.pop %v917
        %v919 = vmul.f32 %v910, 1.442695
        %v920 = vpow.pop %v919
        %v921 = vmul.f32 %v911, 1.442695
        %v922 = vpow.pop %v921
        %v923 = vmul.f32 %v912, 1.442695
        %v924 = vpow.pop %v923
        %v925 = vmul.f32 %v913, 1.442695
        %v926 = vpow.pop %v925
        %v927 = vmul.f32 %v914, 1.442695
        %v928 = vpow.pop %v927
        %v929 = vmul.f32 %v915, 1.442695
        %v930 = vpow.pop %v929
        %v931 = vmul.f32 %v916, 1.442695
        %v932 = vpow.pop %v931
        %v933 = vmul.f32 %v522, %v918
        %v934 = vmul.f32 %v540, %v920
        %v935 = vmul.f32 %v558, %v922
        %v936 = vmul.f32 %v576, %v924
        %v937 = vmul.f32 %v594, %v926
        %v938 = vmul.f32 %v612, %v928
        %v939 = vmul.f32 %v630, %v930
        %v940 = vmul.f32 %v648, %v932
        %v941 = vrot.slane %v933, 4
        %v942 = vadd.f32 %v933, %v941
        %v943 = vrot.slane %v942, 2
        %v944 = vadd.f32 %v942, %v943
        %v945 = vrot.slane %v944, 1
        %v946 = vadd.f32 %v944, %v945
        %v947 = vrot.slane %v934, 4
        %v948 = vadd.f32 %v934, %v947
        %v949 = vrot.slane %v948, 2
        %v950 = vadd.f32 %v948, %v949
        %v951 = vrot.slane %v950, 1
        %v952 = vadd.f32 %v950, %v951
        %v953 = vrot.slane %v935, 4
        %v954 = vadd.f32 %v935, %v953
        %v955 = vrot.slane %v954, 2
        %v956 = vadd.f32 %v954, %v955
        %v957 = vrot.slane %v956, 1
        %v958 = vadd.f32 %v956, %v957
        %v959 = vrot.slane %v936, 4
        %v960 = vadd.f32 %v936, %v959
        %v961 = vrot.slane %v960, 2
        %v962 = vadd.f32 %v960, %v961
        %v963 = vrot.slane %v962, 1
        %v964 = vadd.f32 %v962, %v963
        %v965 = vrot.slane %v937, 4
        %v966 = vadd.f32 %v937, %v965
        %v967 = vrot.slane %v966, 2
        %v968 = vadd.f32 %v966, %v967
        %v969 = vrot.slane %v968, 1
        %v970 = vadd.f32 %v968, %v969
        %v971 = vrot.slane %v938, 4
        %v972 = vadd.f32 %v938, %v971
        %v973 = vrot.slane %v972, 2
        %v974 = vadd.f32 %v972, %v973
        %v975 = vrot.slane %v974, 1
        %v976 = vadd.f32 %v974, %v975
        %v977 = vrot.slane %v939, 4
        %v978 = vadd.f32 %v939, %v977
        %v979 = vrot.slane %v978, 2
        %v980 = vadd.f32 %v978, %v979
        %v981 = vrot.slane %v980, 1
        %v982 = vadd.f32 %v980, %v981
        %v983 = vrot.slane %v940, 4
        %v984 = vadd.f32 %v940, %v983
        %v985 = vrot.slane %v984, 2
        %v986 = vadd.f32 %v984, %v985
        %v987 = vrot.slane %v986, 1
        %v988 = vadd.f32 %v986, %v987
        %v989 = vrot.slane %v918, 4
        %v990 = vadd.f32 %v918, %v989
        %v991 = vrot.slane %v990, 2
        %v992 = vadd.f32 %v990, %v991
        %v993 = vrot.slane %v992, 1
        %v994 = vadd.f32 %v992, %v993
        %v995 = vrot.slane %v920, 4
        %v996 = vadd.f32 %v920, %v995
        %v997 = vrot.slane %v996, 2
        %v998 = vadd.f32 %v996, %v997
        %v999 = vrot.slane %v998, 1
        %v1000 = vadd.f32 %v998, %v999
        %v1001 = vrot.slane %v922, 4
        %v1002 = vadd.f32 %v922, %v1001
        %v1003 = vrot.slane %v1002, 2
        %v1004 = vadd.f32 %v1002, %v1003
        %v1005 = vrot.slane %v1004, 1
        %v1006 = vadd.f32 %v1004, %v1005
        %v1007 = vrot.slane %v924, 4
        %v1008 = vadd.f32 %v924, %v1007
        %v1009 = vrot.slane %v1008, 2
        %v1010 = vadd.f32 %v1008, %v1009
        %v1011 = vrot.slane %v1010, 1
        %v1012 = vadd.f32 %v1010, %v1011
        %v1013 = vrot.slane %v926, 4
        %v1014 = vadd.f32 %v926, %v1013
        %v1015 = vrot.slane %v1014, 2
        %v1016 = vadd.f32 %v1014, %v1015
        %v1017 = vrot.slane %v1016, 1
        %v1018 = vadd.f32 %v1016, %v1017
        %v1019 = vrot.slane %v928, 4
        %v1020 = vadd.f32 %v928, %v1019
        %v1021 = vrot.slane %v1020, 2
        %v1022 = vadd.f32 %v1020, %v1021
        %v1023 = vrot.slane %v1022, 1
        %v1024 = vadd.f32 %v1022, %v1023
        %v1025 = vrot.slane %v930, 4
        %v1026 = vadd.f32 %v930, %v1025
        %v1027 = vrot.slane %v1026, 2
        %v1028 = vadd.f32 %v1026, %v1027
        %v1029 = vrot.slane %v1028, 1
        %v1030 = vadd.f32 %v1028, %v1029
        %v1031 = vrot.slane %v932, 4
        %v1032 = vadd.f32 %v932, %v1031
        %v1033 = vrot.slane %v1032, 2
        %v1034 = vadd.f32 %v1032, %v1033
        %v1035 = vrot.slane %v1034, 1
        %v1036 = vadd.f32 %v1034, %v1035
        %v1037 = vrcp.pop %v994
        %v1038 = vmul.f32 1.0, %v1037
        %v1039 = vrcp.pop %v1000
        %v1040 = vmul.f32 1.0, %v1039
        %v1041 = vrcp.pop %v1006
        %v1042 = vmul.f32 1.0, %v1041
        %v1043 = vrcp.pop %v1012
        %v1044 = vmul.f32 1.0, %v1043
        %v1045 = vrcp.pop %v1018
        %v1046 = vmul.f32 1.0, %v1045
        %v1047 = vrcp.pop %v1024
        %v1048 = vmul.f32 1.0, %v1047
        %v1049 = vrcp.pop %v1030
        %v1050 = vmul.f32 1.0, %v1049
        %v1051 = vrcp.pop %v1036
        %v1052 = vmul.f32 1.0, %v1051
        %v1053 = vmul.f32 %v946, %v1038
        %v1054 = vmul.f32 %v952, %v1040
        %v1055 = vmul.f32 %v958, %v1042
        %v1056 = vmul.f32 %v964, %v1044
        %v1057 = vmul.f32 %v970, %v1046
        %v1058 = vmul.f32 %v976, %v1048
        %v1059 = vmul.f32 %v982, %v1050
        %v1060 = vmul.f32 %v988, %v1052
        %1061 = vrot.lane.b32.xlu0 %v721, 96
        %v1062 = vpop.permute.xlu0 %1061
        %1063 = vrot.lane.b32.xlu0 %v722, 96
        %v1064 = vpop.permute.xlu0 %1063
        %1065 = vrot.lane.b32.xlu0 %v723, 96
        %v1066 = vpop.permute.xlu0 %1065
        %1067 = vrot.lane.b32.xlu0 %v724, 96
        %v1068 = vpop.permute.xlu0 %1067
        %1069 = vrot.lane.b32.xlu0 %v725, 96
        %v1070 = vpop.permute.xlu0 %1069
        %1071 = vrot.lane.b32.xlu0 %v726, 96
        %v1072 = vpop.permute.xlu0 %1071
        %1073 = vrot.lane.b32.xlu0 %v727, 96
        %v1074 = vpop.permute.xlu0 %1073
        %1075 = vrot.lane.b32.xlu0 %v728, 96
        %v1076 = vpop.permute.xlu0 %1075
        %vm1085 = vcmask 785408
        %v1086 = vsel %vm1085, 0.0, %v1062
        %v1087 = vsel %vm1085, 0.0, %v1064
        %v1088 = vsel %vm1085, 0.0, %v1066
        %v1089 = vsel %vm1085, 0.0, %v1068
        %v1090 = vsel %vm1085, 0.0, %v1070
        %v1091 = vsel %vm1085, 0.0, %v1072
        %v1092 = vsel %vm1085, 0.0, %v1074
        %v1093 = vsel %vm1085, 0.0, %v1076
        %v1094 = vlaneseq
        %v1095 = vshrl.u32 %v1094, 7
        %v1096 = vsub.s32 0, %v1095
        %v1097 = vrot.slane %v1086, %v1096
        %v1098 = vlaneseq
        %v1099 = vshrl.u32 %v1098, 7
        %v1100 = vsub.s32 0, %v1099
        %v1101 = vrot.slane %v1087, %v1100
        %v1102 = vlaneseq
        %v1103 = vshrl.u32 %v1102, 7
        %v1104 = vsub.s32 0, %v1103
        %v1105 = vrot.slane %v1088, %v1104
        %v1106 = vlaneseq
        %v1107 = vshrl.u32 %v1106, 7
        %v1108 = vsub.s32 0, %v1107
        %v1109 = vrot.slane %v1089, %v1108
        %v1110 = vlaneseq
        %v1111 = vshrl.u32 %v1110, 7
        %v1112 = vsub.s32 0, %v1111
        %v1113 = vrot.slane %v1090, %v1112
        %v1114 = vlaneseq
        %v1115 = vshrl.u32 %v1114, 7
        %v1116 = vsub.s32 0, %v1115
        %v1117 = vrot.slane %v1091, %v1116
        %v1118 = vlaneseq
        %v1119 = vshrl.u32 %v1118, 7
        %v1120 = vsub.s32 0, %v1119
        %v1121 = vrot.slane %v1092, %v1120
        %v1122 = vlaneseq
        %v1123 = vshrl.u32 %v1122, 7
        %v1124 = vsub.s32 0, %v1123
        %v1125 = vrot.slane %v1093, %v1124
        %v1126 = vmul.f32 %v528, %v1097
        %v1127 = vmul.f32 %v530, 0.0
        %v1128 = vmul.f32 %v546, %v1101
        %v1129 = vmul.f32 %v548, 0.0
        %v1130 = vmul.f32 %v564, %v1105
        %v1131 = vmul.f32 %v566, 0.0
        %v1132 = vmul.f32 %v582, %v1109
        %v1133 = vmul.f32 %v584, 0.0
        %v1134 = vmul.f32 %v600, %v1113
        %v1135 = vmul.f32 %v602, 0.0
        %v1136 = vmul.f32 %v618, %v1117
        %v1137 = vmul.f32 %v620, 0.0
        %v1138 = vmul.f32 %v636, %v1121
        %v1139 = vmul.f32 %v638, 0.0
        %v1140 = vmul.f32 %v654, %v1125
        %v1141 = vmul.f32 %v656, 0.0
        %v1142 = vadd.f32 %v1126, %v1127
        %1143 = vadd.xlane.f32.xlu0 %v1142
        %v1144 = vpop.xlane.xlu0 %1143
        %v1145 = vadd.f32 %v1128, %v1129
        %1146 = vadd.xlane.f32.xlu0 %v1145
        %v1147 = vpop.xlane.xlu0 %1146
        %v1148 = vadd.f32 %v1130, %v1131
        %1149 = vadd.xlane.f32.xlu0 %v1148
        %v1150 = vpop.xlane.xlu0 %1149
        %v1151 = vadd.f32 %v1132, %v1133
        %1152 = vadd.xlane.f32.xlu0 %v1151
        %v1153 = vpop.xlane.xlu0 %1152
        %v1154 = vadd.f32 %v1134, %v1135
        %1155 = vadd.xlane.f32.xlu0 %v1154
        %v1156 = vpop.xlane.xlu0 %1155
        %v1157 = vadd.f32 %v1136, %v1137
        %1158 = vadd.xlane.f32.xlu0 %v1157
        %v1159 = vpop.xlane.xlu0 %1158
        %v1160 = vadd.f32 %v1138, %v1139
        %1161 = vadd.xlane.f32.xlu0 %v1160
        %v1162 = vpop.xlane.xlu0 %1161
        %v1163 = vadd.f32 %v1140, %v1141
        %1164 = vadd.xlane.f32.xlu0 %v1163
        %v1165 = vpop.xlane.xlu0 %1164
        %v1166 = vtanh.pop %v1144
        %v1167 = vtanh.pop %v1147
        %v1168 = vtanh.pop %v1150
        %v1169 = vtanh.pop %v1153
        %v1170 = vtanh.pop %v1156
        %v1171 = vtanh.pop %v1159
        %v1172 = vtanh.pop %v1162
        %v1173 = vtanh.pop %v1165
        %v1174 = vrot.slane %v1166, 4
        %v1175 = vmax.f32 %v1166, %v1174
        %v1176 = vrot.slane %v1175, 2
        %v1177 = vmax.f32 %v1175, %v1176
        %v1178 = vrot.slane %v1177, 1
        %v1179 = vmax.f32 %v1177, %v1178
        %v1180 = vrot.slane %v1167, 4
        %v1181 = vmax.f32 %v1167, %v1180
        %v1182 = vrot.slane %v1181, 2
        %v1183 = vmax.f32 %v1181, %v1182
        %v1184 = vrot.slane %v1183, 1
        %v1185 = vmax.f32 %v1183, %v1184
        %v1186 = vrot.slane %v1168, 4
        %v1187 = vmax.f32 %v1168, %v1186
        %v1188 = vrot.slane %v1187, 2
        %v1189 = vmax.f32 %v1187, %v1188
        %v1190 = vrot.slane %v1189, 1
        %v1191 = vmax.f32 %v1189, %v1190
        %v1192 = vrot.slane %v1169, 4
        %v1193 = vmax.f32 %v1169, %v1192
        %v1194 = vrot.slane %v1193, 2
        %v1195 = vmax.f32 %v1193, %v1194
        %v1196 = vrot.slane %v1195, 1
        %v1197 = vmax.f32 %v1195, %v1196
        %v1198 = vrot.slane %v1170, 4
        %v1199 = vmax.f32 %v1170, %v1198
        %v1200 = vrot.slane %v1199, 2
        %v1201 = vmax.f32 %v1199, %v1200
        %v1202 = vrot.slane %v1201, 1
        %v1203 = vmax.f32 %v1201, %v1202
        %v1204 = vrot.slane %v1171, 4
        %v1205 = vmax.f32 %v1171, %v1204
        %v1206 = vrot.slane %v1205, 2
        %v1207 = vmax.f32 %v1205, %v1206
        %v1208 = vrot.slane %v1207, 1
        %v1209 = vmax.f32 %v1207, %v1208
        %v1210 = vrot.slane %v1172, 4
        %v1211 = vmax.f32 %v1172, %v1210
        %v1212 = vrot.slane %v1211, 2
        %v1213 = vmax.f32 %v1211, %v1212
        %v1214 = vrot.slane %v1213, 1
        %v1215 = vmax.f32 %v1213, %v1214
        %v1216 = vrot.slane %v1173, 4
        %v1217 = vmax.f32 %v1173, %v1216
        %v1218 = vrot.slane %v1217, 2
        %v1219 = vmax.f32 %v1217, %v1218
        %v1220 = vrot.slane %v1219, 1
        %v1221 = vmax.f32 %v1219, %v1220
        %v1222 = vsub.f32 %v1166, %v1179
        %v1223 = vsub.f32 %v1167, %v1185
        %v1224 = vsub.f32 %v1168, %v1191
        %v1225 = vsub.f32 %v1169, %v1197
        %v1226 = vsub.f32 %v1170, %v1203
        %v1227 = vsub.f32 %v1171, %v1209
        %v1228 = vsub.f32 %v1172, %v1215
        %v1229 = vsub.f32 %v1173, %v1221
        %v1230 = vmul.f32 %v1222, 1.442695
        %v1231 = vpow.pop %v1230
        %v1232 = vmul.f32 %v1223, 1.442695
        %v1233 = vpow.pop %v1232
        %v1234 = vmul.f32 %v1224, 1.442695
        %v1235 = vpow.pop %v1234
        %v1236 = vmul.f32 %v1225, 1.442695
        %v1237 = vpow.pop %v1236
        %v1238 = vmul.f32 %v1226, 1.442695
        %v1239 = vpow.pop %v1238
        %v1240 = vmul.f32 %v1227, 1.442695
        %v1241 = vpow.pop %v1240
        %v1242 = vmul.f32 %v1228, 1.442695
        %v1243 = vpow.pop %v1242
        %v1244 = vmul.f32 %v1229, 1.442695
        %v1245 = vpow.pop %v1244
        %v1246 = vmul.f32 %v528, %v1231
        %v1247 = vmul.f32 %v546, %v1233
        %v1248 = vmul.f32 %v564, %v1235
        %v1249 = vmul.f32 %v582, %v1237
        %v1250 = vmul.f32 %v600, %v1239
        %v1251 = vmul.f32 %v618, %v1241
        %v1252 = vmul.f32 %v636, %v1243
        %v1253 = vmul.f32 %v654, %v1245
        %v1254 = vrot.slane %v1246, 4
        %v1255 = vadd.f32 %v1246, %v1254
        %v1256 = vrot.slane %v1255, 2
        %v1257 = vadd.f32 %v1255, %v1256
        %v1258 = vrot.slane %v1257, 1
        %v1259 = vadd.f32 %v1257, %v1258
        %v1260 = vrot.slane %v1247, 4
        %v1261 = vadd.f32 %v1247, %v1260
        %v1262 = vrot.slane %v1261, 2
        %v1263 = vadd.f32 %v1261, %v1262
        %v1264 = vrot.slane %v1263, 1
        %v1265 = vadd.f32 %v1263, %v1264
        %v1266 = vrot.slane %v1248, 4
        %v1267 = vadd.f32 %v1248, %v1266
        %v1268 = vrot.slane %v1267, 2
        %v1269 = vadd.f32 %v1267, %v1268
        %v1270 = vrot.slane %v1269, 1
        %v1271 = vadd.f32 %v1269, %v1270
        %v1272 = vrot.slane %v1249, 4
        %v1273 = vadd.f32 %v1249, %v1272
        %v1274 = vrot.slane %v1273, 2
        %v1275 = vadd.f32 %v1273, %v1274
        %v1276 = vrot.slane %v1275, 1
        %v1277 = vadd.f32 %v1275, %v1276
        %v1278 = vrot.slane %v1250, 4
        %v1279 = vadd.f32 %v1250, %v1278
        %v1280 = vrot.slane %v1279, 2
        %v1281 = vadd.f32 %v1279, %v1280
        %v1282 = vrot.slane %v1281, 1
        %v1283 = vadd.f32 %v1281, %v1282
        %v1284 = vrot.slane %v1251, 4
        %v1285 = vadd.f32 %v1251, %v1284
        %v1286 = vrot.slane %v1285, 2
        %v1287 = vadd.f32 %v1285, %v1286
        %v1288 = vrot.slane %v1287, 1
        %v1289 = vadd.f32 %v1287, %v1288
        %v1290 = vrot.slane %v1252, 4
        %v1291 = vadd.f32 %v1252, %v1290
        %v1292 = vrot.slane %v1291, 2
        %v1293 = vadd.f32 %v1291, %v1292
        %v1294 = vrot.slane %v1293, 1
        %v1295 = vadd.f32 %v1293, %v1294
        %v1296 = vrot.slane %v1253, 4
        %v1297 = vadd.f32 %v1253, %v1296
        %v1298 = vrot.slane %v1297, 2
        %v1299 = vadd.f32 %v1297, %v1298
        %v1300 = vrot.slane %v1299, 1
        %v1301 = vadd.f32 %v1299, %v1300
        %v1302 = vrot.slane %v1231, 4
        %v1303 = vadd.f32 %v1231, %v1302
        %v1304 = vrot.slane %v1303, 2
        %v1305 = vadd.f32 %v1303, %v1304
        %v1306 = vrot.slane %v1305, 1
        %v1307 = vadd.f32 %v1305, %v1306
        %v1308 = vrot.slane %v1233, 4
        %v1309 = vadd.f32 %v1233, %v1308
        %v1310 = vrot.slane %v1309, 2
        %v1311 = vadd.f32 %v1309, %v1310
        %v1312 = vrot.slane %v1311, 1
        %v1313 = vadd.f32 %v1311, %v1312
        %v1314 = vrot.slane %v1235, 4
        %v1315 = vadd.f32 %v1235, %v1314
        %v1316 = vrot.slane %v1315, 2
        %v1317 = vadd.f32 %v1315, %v1316
        %v1318 = vrot.slane %v1317, 1
        %v1319 = vadd.f32 %v1317, %v1318
        %v1320 = vrot.slane %v1237, 4
        %v1321 = vadd.f32 %v1237, %v1320
        %v1322 = vrot.slane %v1321, 2
        %v1323 = vadd.f32 %v1321, %v1322
        %v1324 = vrot.slane %v1323, 1
        %v1325 = vadd.f32 %v1323, %v1324
        %v1326 = vrot.slane %v1239, 4
        %v1327 = vadd.f32 %v1239, %v1326
        %v1328 = vrot.slane %v1327, 2
        %v1329 = vadd.f32 %v1327, %v1328
        %v1330 = vrot.slane %v1329, 1
        %v1331 = vadd.f32 %v1329, %v1330
        %v1332 = vrot.slane %v1241, 4
        %v1333 = vadd.f32 %v1241, %v1332
        %v1334 = vrot.slane %v1333, 2
        %v1335 = vadd.f32 %v1333, %v1334
        %v1336 = vrot.slane %v1335, 1
        %v1337 = vadd.f32 %v1335, %v1336
        %v1338 = vrot.slane %v1243, 4
        %v1339 = vadd.f32 %v1243, %v1338
        %v1340 = vrot.slane %v1339, 2
        %v1341 = vadd.f32 %v1339, %v1340
        %v1342 = vrot.slane %v1341, 1
        %v1343 = vadd.f32 %v1341, %v1342
        %v1344 = vrot.slane %v1245, 4
        %v1345 = vadd.f32 %v1245, %v1344
        %v1346 = vrot.slane %v1345, 2
        %v1347 = vadd.f32 %v1345, %v1346
        %v1348 = vrot.slane %v1347, 1
        %v1349 = vadd.f32 %v1347, %v1348
        %v1350 = vrcp.pop %v1307
        %v1351 = vmul.f32 1.0, %v1350
        %v1352 = vrcp.pop %v1313
        %v1353 = vmul.f32 1.0, %v1352
        %v1354 = vrcp.pop %v1319
        %v1355 = vmul.f32 1.0, %v1354
        %v1356 = vrcp.pop %v1325
        %v1357 = vmul.f32 1.0, %v1356
        %v1358 = vrcp.pop %v1331
        %v1359 = vmul.f32 1.0, %v1358
        %v1360 = vrcp.pop %v1337
        %v1361 = vmul.f32 1.0, %v1360
        %v1362 = vrcp.pop %v1343
        %v1363 = vmul.f32 1.0, %v1362
        %v1364 = vrcp.pop %v1349
        %v1365 = vmul.f32 1.0, %v1364
        %v1366 = vmul.f32 %v1259, %v1351
        %v1367 = vmul.f32 %v1265, %v1353
        %v1368 = vmul.f32 %v1271, %v1355
        %v1369 = vmul.f32 %v1277, %v1357
        %v1370 = vmul.f32 %v1283, %v1359
        %v1371 = vmul.f32 %v1289, %v1361
        %v1372 = vmul.f32 %v1295, %v1363
        %v1373 = vmul.f32 %v1301, %v1365
        %1382 = vrot.lane.b32.xlu0 %v1053, 32
        %v1383 = vpop.permute.xlu0 %1382
        %1384 = vrot.lane.b32.xlu0 %v1054, 32
        %v1385 = vpop.permute.xlu0 %1384
        %1386 = vrot.lane.b32.xlu0 %v1055, 32
        %v1387 = vpop.permute.xlu0 %1386
        %1388 = vrot.lane.b32.xlu0 %v1056, 32
        %v1389 = vpop.permute.xlu0 %1388
        %1390 = vrot.lane.b32.xlu0 %v1057, 32
        %v1391 = vpop.permute.xlu0 %1390
        %1392 = vrot.lane.b32.xlu0 %v1058, 32
        %v1393 = vpop.permute.xlu0 %1392
        %1394 = vrot.lane.b32.xlu0 %v1059, 32
        %v1395 = vpop.permute.xlu0 %1394
        %1396 = vrot.lane.b32.xlu0 %v1060, 32
        %v1397 = vpop.permute.xlu0 %1396
        %v1406 = vsel %vm382, 0.0, %v1383
        %v1407 = vsel %vm382, 0.0, %v1385
        %v1408 = vsel %vm382, 0.0, %v1387
        %v1409 = vsel %vm382, 0.0, %v1389
        %v1410 = vsel %vm382, 0.0, %v1391
        %v1411 = vsel %vm382, 0.0, %v1393
        %v1412 = vsel %vm382, 0.0, %v1395
        %v1413 = vsel %vm382, 0.0, %v1397
        %v1414 = vsel %vm769, %v1406, 0.0
        %v1415 = vsel %vm769, %v1407, 0.0
        %v1416 = vsel %vm769, %v1408, 0.0
        %v1417 = vsel %vm769, %v1409, 0.0
        %v1418 = vsel %vm769, %v1410, 0.0
        %v1419 = vsel %vm769, %v1411, 0.0
        %v1420 = vsel %vm769, %v1412, 0.0
        %v1421 = vsel %vm769, %v1413, 0.0
        %v1422 = vlaneseq
        %v1423 = vshrl.u32 %v1422, 7
        %v1424 = vsub.s32 0, %v1423
        %v1425 = vrot.slane %v1414, %v1424
        %v1426 = vlaneseq
        %v1427 = vshrl.u32 %v1426, 7
        %v1428 = vsub.s32 0, %v1427
        %v1429 = vrot.slane %v1415, %v1428
        %v1430 = vlaneseq
        %v1431 = vshrl.u32 %v1430, 7
        %v1432 = vsub.s32 0, %v1431
        %v1433 = vrot.slane %v1416, %v1432
        %v1434 = vlaneseq
        %v1435 = vshrl.u32 %v1434, 7
        %v1436 = vsub.s32 0, %v1435
        %v1437 = vrot.slane %v1417, %v1436
        %v1438 = vlaneseq
        %v1439 = vshrl.u32 %v1438, 7
        %v1440 = vsub.s32 0, %v1439
        %v1441 = vrot.slane %v1418, %v1440
        %v1442 = vlaneseq
        %v1443 = vshrl.u32 %v1442, 7
        %v1444 = vsub.s32 0, %v1443
        %v1445 = vrot.slane %v1419, %v1444
        %v1446 = vlaneseq
        %v1447 = vshrl.u32 %v1446, 7
        %v1448 = vsub.s32 0, %v1447
        %v1449 = vrot.slane %v1420, %v1448
        %v1450 = vlaneseq
        %v1451 = vshrl.u32 %v1450, 7
        %v1452 = vsub.s32 0, %v1451
        %v1453 = vrot.slane %v1421, %v1452
        %v1454 = vmul.f32 %v534, 0.0
        %v1455 = vmul.f32 %v536, %v1425
        %v1456 = vmul.f32 %v552, 0.0
        %v1457 = vmul.f32 %v554, %v1429
        %v1458 = vmul.f32 %v570, 0.0
        %v1459 = vmul.f32 %v572, %v1433
        %v1460 = vmul.f32 %v588, 0.0
        %v1461 = vmul.f32 %v590, %v1437
        %v1462 = vmul.f32 %v606, 0.0
        %v1463 = vmul.f32 %v608, %v1441
        %v1464 = vmul.f32 %v624, 0.0
        %v1465 = vmul.f32 %v626, %v1445
        %v1466 = vmul.f32 %v642, 0.0
        %v1467 = vmul.f32 %v644, %v1449
        %v1468 = vmul.f32 %v660, 0.0
        %v1469 = vmul.f32 %v662, %v1453
        %v1470 = vadd.f32 %v1454, %v1455
        %1471 = vadd.xlane.f32.xlu0 %v1470
        %v1472 = vpop.xlane.xlu0 %1471
        %v1473 = vadd.f32 %v1456, %v1457
        %1474 = vadd.xlane.f32.xlu0 %v1473
        %v1475 = vpop.xlane.xlu0 %1474
        %v1476 = vadd.f32 %v1458, %v1459
        %1477 = vadd.xlane.f32.xlu0 %v1476
        %v1478 = vpop.xlane.xlu0 %1477
        %v1479 = vadd.f32 %v1460, %v1461
        %1480 = vadd.xlane.f32.xlu0 %v1479
        %v1481 = vpop.xlane.xlu0 %1480
        %v1482 = vadd.f32 %v1462, %v1463
        %1483 = vadd.xlane.f32.xlu0 %v1482
        %v1484 = vpop.xlane.xlu0 %1483
        %v1485 = vadd.f32 %v1464, %v1465
        %1486 = vadd.xlane.f32.xlu0 %v1485
        %v1487 = vpop.xlane.xlu0 %1486
        %v1488 = vadd.f32 %v1466, %v1467
        %1489 = vadd.xlane.f32.xlu0 %v1488
        %v1490 = vpop.xlane.xlu0 %1489
        %v1491 = vadd.f32 %v1468, %v1469
        %1492 = vadd.xlane.f32.xlu0 %v1491
        %v1493 = vpop.xlane.xlu0 %1492
        %v1494 = vtanh.pop %v1472
        %v1495 = vtanh.pop %v1475
        %v1496 = vtanh.pop %v1478
        %v1497 = vtanh.pop %v1481
        %v1498 = vtanh.pop %v1484
        %v1499 = vtanh.pop %v1487
        %v1500 = vtanh.pop %v1490
        %v1501 = vtanh.pop %v1493
        %v1502 = vrot.slane %v1494, 4
        %v1503 = vmax.f32 %v1494, %v1502
        %v1504 = vrot.slane %v1503, 2
        %v1505 = vmax.f32 %v1503, %v1504
        %v1506 = vrot.slane %v1505, 1
        %v1507 = vmax.f32 %v1505, %v1506
        %v1508 = vrot.slane %v1495, 4
        %v1509 = vmax.f32 %v1495, %v1508
        %v1510 = vrot.slane %v1509, 2
        %v1511 = vmax.f32 %v1509, %v1510
        %v1512 = vrot.slane %v1511, 1
        %v1513 = vmax.f32 %v1511, %v1512
        %v1514 = vrot.slane %v1496, 4
        %v1515 = vmax.f32 %v1496, %v1514
        %v1516 = vrot.slane %v1515, 2
        %v1517 = vmax.f32 %v1515, %v1516
        %v1518 = vrot.slane %v1517, 1
        %v1519 = vmax.f32 %v1517, %v1518
        %v1520 = vrot.slane %v1497, 4
        %v1521 = vmax.f32 %v1497, %v1520
        %v1522 = vrot.slane %v1521, 2
        %v1523 = vmax.f32 %v1521, %v1522
        %v1524 = vrot.slane %v1523, 1
        %v1525 = vmax.f32 %v1523, %v1524
        %v1526 = vrot.slane %v1498, 4
        %v1527 = vmax.f32 %v1498, %v1526
        %v1528 = vrot.slane %v1527, 2
        %v1529 = vmax.f32 %v1527, %v1528
        %v1530 = vrot.slane %v1529, 1
        %v1531 = vmax.f32 %v1529, %v1530
        %v1532 = vrot.slane %v1499, 4
        %v1533 = vmax.f32 %v1499, %v1532
        %v1534 = vrot.slane %v1533, 2
        %v1535 = vmax.f32 %v1533, %v1534
        %v1536 = vrot.slane %v1535, 1
        %v1537 = vmax.f32 %v1535, %v1536
        %v1538 = vrot.slane %v1500, 4
        %v1539 = vmax.f32 %v1500, %v1538
        %v1540 = vrot.slane %v1539, 2
        %v1541 = vmax.f32 %v1539, %v1540
        %v1542 = vrot.slane %v1541, 1
        %v1543 = vmax.f32 %v1541, %v1542
        %v1544 = vrot.slane %v1501, 4
        %v1545 = vmax.f32 %v1501, %v1544
        %v1546 = vrot.slane %v1545, 2
        %v1547 = vmax.f32 %v1545, %v1546
        %v1548 = vrot.slane %v1547, 1
        %v1549 = vmax.f32 %v1547, %v1548
        %v1550 = vsub.f32 %v1494, %v1507
        %v1551 = vsub.f32 %v1495, %v1513
        %v1552 = vsub.f32 %v1496, %v1519
        %v1553 = vsub.f32 %v1497, %v1525
        %v1554 = vsub.f32 %v1498, %v1531
        %v1555 = vsub.f32 %v1499, %v1537
        %v1556 = vsub.f32 %v1500, %v1543
        %v1557 = vsub.f32 %v1501, %v1549
        %v1558 = vmul.f32 %v1550, 1.442695
        %v1559 = vpow.pop %v1558
        %v1560 = vmul.f32 %v1551, 1.442695
        %v1561 = vpow.pop %v1560
        %v1562 = vmul.f32 %v1552, 1.442695
        %v1563 = vpow.pop %v1562
        %v1564 = vmul.f32 %v1553, 1.442695
        %v1565 = vpow.pop %v1564
        %v1566 = vmul.f32 %v1554, 1.442695
        %v1567 = vpow.pop %v1566
        %v1568 = vmul.f32 %v1555, 1.442695
        %v1569 = vpow.pop %v1568
        %v1570 = vmul.f32 %v1556, 1.442695
        %v1571 = vpow.pop %v1570
        %v1572 = vmul.f32 %v1557, 1.442695
        %v1573 = vpow.pop %v1572
        %v1574 = vmul.f32 %v536, %v1559
        %v1575 = vmul.f32 %v554, %v1561
        %v1576 = vmul.f32 %v572, %v1563
        %v1577 = vmul.f32 %v590, %v1565
        %v1578 = vmul.f32 %v608, %v1567
        %v1579 = vmul.f32 %v626, %v1569
        %v1580 = vmul.f32 %v644, %v1571
        %v1581 = vmul.f32 %v662, %v1573
        %v1582 = vrot.slane %v1574, 4
        %v1583 = vadd.f32 %v1574, %v1582
        %v1584 = vrot.slane %v1583, 2
        %v1585 = vadd.f32 %v1583, %v1584
        %v1586 = vrot.slane %v1585, 1
        %v1587 = vadd.f32 %v1585, %v1586
        %v1588 = vrot.slane %v1575, 4
        %v1589 = vadd.f32 %v1575, %v1588
        %v1590 = vrot.slane %v1589, 2
        %v1591 = vadd.f32 %v1589, %v1590
        %v1592 = vrot.slane %v1591, 1
        %v1593 = vadd.f32 %v1591, %v1592
        %v1594 = vrot.slane %v1576, 4
        %v1595 = vadd.f32 %v1576, %v1594
        %v1596 = vrot.slane %v1595, 2
        %v1597 = vadd.f32 %v1595, %v1596
        %v1598 = vrot.slane %v1597, 1
        %v1599 = vadd.f32 %v1597, %v1598
        %v1600 = vrot.slane %v1577, 4
        %v1601 = vadd.f32 %v1577, %v1600
        %v1602 = vrot.slane %v1601, 2
        %v1603 = vadd.f32 %v1601, %v1602
        %v1604 = vrot.slane %v1603, 1
        %v1605 = vadd.f32 %v1603, %v1604
        %v1606 = vrot.slane %v1578, 4
        %v1607 = vadd.f32 %v1578, %v1606
        %v1608 = vrot.slane %v1607, 2
        %v1609 = vadd.f32 %v1607, %v1608
        %v1610 = vrot.slane %v1609, 1
        %v1611 = vadd.f32 %v1609, %v1610
        %v1612 = vrot.slane %v1579, 4
        %v1613 = vadd.f32 %v1579, %v1612
        %v1614 = vrot.slane %v1613, 2
        %v1615 = vadd.f32 %v1613, %v1614
        %v1616 = vrot.slane %v1615, 1
        %v1617 = vadd.f32 %v1615, %v1616
        %v1618 = vrot.slane %v1580, 4
        %v1619 = vadd.f32 %v1580, %v1618
        %v1620 = vrot.slane %v1619, 2
        %v1621 = vadd.f32 %v1619, %v1620
        %v1622 = vrot.slane %v1621, 1
        %v1623 = vadd.f32 %v1621, %v1622
        %v1624 = vrot.slane %v1581, 4
        %v1625 = vadd.f32 %v1581, %v1624
        %v1626 = vrot.slane %v1625, 2
        %v1627 = vadd.f32 %v1625, %v1626
        %v1628 = vrot.slane %v1627, 1
        %v1629 = vadd.f32 %v1627, %v1628
        %v1630 = vrot.slane %v1559, 4
        %v1631 = vadd.f32 %v1559, %v1630
        %v1632 = vrot.slane %v1631, 2
        %v1633 = vadd.f32 %v1631, %v1632
        %v1634 = vrot.slane %v1633, 1
        %v1635 = vadd.f32 %v1633, %v1634
        %v1636 = vrot.slane %v1561, 4
        %v1637 = vadd.f32 %v1561, %v1636
        %v1638 = vrot.slane %v1637, 2
        %v1639 = vadd.f32 %v1637, %v1638
        %v1640 = vrot.slane %v1639, 1
        %v1641 = vadd.f32 %v1639, %v1640
        %v1642 = vrot.slane %v1563, 4
        %v1643 = vadd.f32 %v1563, %v1642
        %v1644 = vrot.slane %v1643, 2
        %v1645 = vadd.f32 %v1643, %v1644
        %v1646 = vrot.slane %v1645, 1
        %v1647 = vadd.f32 %v1645, %v1646
        %v1648 = vrot.slane %v1565, 4
        %v1649 = vadd.f32 %v1565, %v1648
        %v1650 = vrot.slane %v1649, 2
        %v1651 = vadd.f32 %v1649, %v1650
        %v1652 = vrot.slane %v1651, 1
        %v1653 = vadd.f32 %v1651, %v1652
        %v1654 = vrot.slane %v1567, 4
        %v1655 = vadd.f32 %v1567, %v1654
        %v1656 = vrot.slane %v1655, 2
        %v1657 = vadd.f32 %v1655, %v1656
        %v1658 = vrot.slane %v1657, 1
        %v1659 = vadd.f32 %v1657, %v1658
        %v1660 = vrot.slane %v1569, 4
        %v1661 = vadd.f32 %v1569, %v1660
        %v1662 = vrot.slane %v1661, 2
        %v1663 = vadd.f32 %v1661, %v1662
        %v1664 = vrot.slane %v1663, 1
        %v1665 = vadd.f32 %v1663, %v1664
        %v1666 = vrot.slane %v1571, 4
        %v1667 = vadd.f32 %v1571, %v1666
        %v1668 = vrot.slane %v1667, 2
        %v1669 = vadd.f32 %v1667, %v1668
        %v1670 = vrot.slane %v1669, 1
        %v1671 = vadd.f32 %v1669, %v1670
        %v1672 = vrot.slane %v1573, 4
        %v1673 = vadd.f32 %v1573, %v1672
        %v1674 = vrot.slane %v1673, 2
        %v1675 = vadd.f32 %v1673, %v1674
        %v1676 = vrot.slane %v1675, 1
        %v1677 = vadd.f32 %v1675, %v1676
        %v1678 = vrcp.pop %v1635
        %v1679 = vmul.f32 1.0, %v1678
        %v1680 = vrcp.pop %v1641
        %v1681 = vmul.f32 1.0, %v1680
        %v1682 = vrcp.pop %v1647
        %v1683 = vmul.f32 1.0, %v1682
        %v1684 = vrcp.pop %v1653
        %v1685 = vmul.f32 1.0, %v1684
        %v1686 = vrcp.pop %v1659
        %v1687 = vmul.f32 1.0, %v1686
        %v1688 = vrcp.pop %v1665
        %v1689 = vmul.f32 1.0, %v1688
        %v1690 = vrcp.pop %v1671
        %v1691 = vmul.f32 1.0, %v1690
        %v1692 = vrcp.pop %v1677
        %v1693 = vmul.f32 1.0, %v1692
        %v1694 = vmul.f32 %v1587, %v1679
        %v1695 = vmul.f32 %v1593, %v1681
        %v1696 = vmul.f32 %v1599, %v1683
        %v1697 = vmul.f32 %v1605, %v1685
        %v1698 = vmul.f32 %v1611, %v1687
        %v1699 = vmul.f32 %v1617, %v1689
        %v1700 = vmul.f32 %v1623, %v1691
        %v1701 = vmul.f32 %v1629, %v1693
        %1710 = vrot.lane.b32.xlu0 %v1366, 32
        %v1711 = vpop.permute.xlu0 %1710
        %1712 = vrot.lane.b32.xlu0 %v1367, 32
        %v1713 = vpop.permute.xlu0 %1712
        %1714 = vrot.lane.b32.xlu0 %v1368, 32
        %v1715 = vpop.permute.xlu0 %1714
        %1716 = vrot.lane.b32.xlu0 %v1369, 32
        %v1717 = vpop.permute.xlu0 %1716
        %1718 = vrot.lane.b32.xlu0 %v1370, 32
        %v1719 = vpop.permute.xlu0 %1718
        %1720 = vrot.lane.b32.xlu0 %v1371, 32
        %v1721 = vpop.permute.xlu0 %1720
        %1722 = vrot.lane.b32.xlu0 %v1372, 32
        %v1723 = vpop.permute.xlu0 %1722
        %1724 = vrot.lane.b32.xlu0 %v1373, 32
        %v1725 = vpop.permute.xlu0 %1724
        %v1734 = vsel %vm1085, 0.0, %v1711
        %v1735 = vsel %vm1085, 0.0, %v1713
        %v1736 = vsel %vm1085, 0.0, %v1715
        %v1737 = vsel %vm1085, 0.0, %v1717
        %v1738 = vsel %vm1085, 0.0, %v1719
        %v1739 = vsel %vm1085, 0.0, %v1721
        %v1740 = vsel %vm1085, 0.0, %v1723
        %v1741 = vsel %vm1085, 0.0, %v1725
        %v1742 = vlaneseq
        %v1743 = vshrl.u32 %v1742, 7
        %v1744 = vsub.s32 0, %v1743
        %v1745 = vrot.slane %v1734, %v1744
        %v1746 = vlaneseq
        %v1747 = vshrl.u32 %v1746, 7
        %v1748 = vsub.s32 0, %v1747
        %v1749 = vrot.slane %v1735, %v1748
        %v1750 = vlaneseq
        %v1751 = vshrl.u32 %v1750, 7
        %v1752 = vsub.s32 0, %v1751
        %v1753 = vrot.slane %v1736, %v1752
        %v1754 = vlaneseq
        %v1755 = vshrl.u32 %v1754, 7
        %v1756 = vsub.s32 0, %v1755
        %v1757 = vrot.slane %v1737, %v1756
        %v1758 = vlaneseq
        %v1759 = vshrl.u32 %v1758, 7
        %v1760 = vsub.s32 0, %v1759
        %v1761 = vrot.slane %v1738, %v1760
        %v1762 = vlaneseq
        %v1763 = vshrl.u32 %v1762, 7
        %v1764 = vsub.s32 0, %v1763
        %v1765 = vrot.slane %v1739, %v1764
        %v1766 = vlaneseq
        %v1767 = vshrl.u32 %v1766, 7
        %v1768 = vsub.s32 0, %v1767
        %v1769 = vrot.slane %v1740, %v1768
        %v1770 = vlaneseq
        %v1771 = vshrl.u32 %v1770, 7
        %v1772 = vsub.s32 0, %v1771
        %v1773 = vrot.slane %v1741, %v1772
        %v1774 = vmul.f32 %v536, %v1745
        %v1775 = vmul.f32 %v554, %v1749
        %v1776 = vmul.f32 %v572, %v1753
        %v1777 = vmul.f32 %v590, %v1757
        %v1778 = vmul.f32 %v608, %v1761
        %v1779 = vmul.f32 %v626, %v1765
        %v1780 = vmul.f32 %v644, %v1769
        %v1781 = vmul.f32 %v662, %v1773
        %v1782 = vadd.f32 %v1454, %v1774
        %1783 = vadd.xlane.f32.xlu0 %v1782
        %v1784 = vpop.xlane.xlu0 %1783
        %v1785 = vadd.f32 %v1456, %v1775
        %1786 = vadd.xlane.f32.xlu0 %v1785
        %v1787 = vpop.xlane.xlu0 %1786
        %v1788 = vadd.f32 %v1458, %v1776
        %1789 = vadd.xlane.f32.xlu0 %v1788
        %v1790 = vpop.xlane.xlu0 %1789
        %v1791 = vadd.f32 %v1460, %v1777
        %1792 = vadd.xlane.f32.xlu0 %v1791
        %v1793 = vpop.xlane.xlu0 %1792
        %v1794 = vadd.f32 %v1462, %v1778
        %1795 = vadd.xlane.f32.xlu0 %v1794
        %v1796 = vpop.xlane.xlu0 %1795
        %v1797 = vadd.f32 %v1464, %v1779
        %1798 = vadd.xlane.f32.xlu0 %v1797
        %v1799 = vpop.xlane.xlu0 %1798
        %v1800 = vadd.f32 %v1466, %v1780
        %1801 = vadd.xlane.f32.xlu0 %v1800
        %v1802 = vpop.xlane.xlu0 %1801
        %v1803 = vadd.f32 %v1468, %v1781
        %1804 = vadd.xlane.f32.xlu0 %v1803
        %v1805 = vpop.xlane.xlu0 %1804
        %v1806 = vtanh.pop %v1784
        %v1807 = vtanh.pop %v1787
        %v1808 = vtanh.pop %v1790
        %v1809 = vtanh.pop %v1793
        %v1810 = vtanh.pop %v1796
        %v1811 = vtanh.pop %v1799
        %v1812 = vtanh.pop %v1802
        %v1813 = vtanh.pop %v1805
        %v1814 = vrot.slane %v1806, 4
        %v1815 = vmax.f32 %v1806, %v1814
        %v1816 = vrot.slane %v1815, 2
        %v1817 = vmax.f32 %v1815, %v1816
        %v1818 = vrot.slane %v1817, 1
        %v1819 = vmax.f32 %v1817, %v1818
        %v1820 = vrot.slane %v1807, 4
        %v1821 = vmax.f32 %v1807, %v1820
        %v1822 = vrot.slane %v1821, 2
        %v1823 = vmax.f32 %v1821, %v1822
        %v1824 = vrot.slane %v1823, 1
        %v1825 = vmax.f32 %v1823, %v1824
        %v1826 = vrot.slane %v1808, 4
        %v1827 = vmax.f32 %v1808, %v1826
        %v1828 = vrot.slane %v1827, 2
        %v1829 = vmax.f32 %v1827, %v1828
        %v1830 = vrot.slane %v1829, 1
        %v1831 = vmax.f32 %v1829, %v1830
        %v1832 = vrot.slane %v1809, 4
        %v1833 = vmax.f32 %v1809, %v1832
        %v1834 = vrot.slane %v1833, 2
        %v1835 = vmax.f32 %v1833, %v1834
        %v1836 = vrot.slane %v1835, 1
        %v1837 = vmax.f32 %v1835, %v1836
        %v1838 = vrot.slane %v1810, 4
        %v1839 = vmax.f32 %v1810, %v1838
        %v1840 = vrot.slane %v1839, 2
        %v1841 = vmax.f32 %v1839, %v1840
        %v1842 = vrot.slane %v1841, 1
        %v1843 = vmax.f32 %v1841, %v1842
        %v1844 = vrot.slane %v1811, 4
        %v1845 = vmax.f32 %v1811, %v1844
        %v1846 = vrot.slane %v1845, 2
        %v1847 = vmax.f32 %v1845, %v1846
        %v1848 = vrot.slane %v1847, 1
        %v1849 = vmax.f32 %v1847, %v1848
        %v1850 = vrot.slane %v1812, 4
        %v1851 = vmax.f32 %v1812, %v1850
        %v1852 = vrot.slane %v1851, 2
        %v1853 = vmax.f32 %v1851, %v1852
        %v1854 = vrot.slane %v1853, 1
        %v1855 = vmax.f32 %v1853, %v1854
        %v1856 = vrot.slane %v1813, 4
        %v1857 = vmax.f32 %v1813, %v1856
        %v1858 = vrot.slane %v1857, 2
        %v1859 = vmax.f32 %v1857, %v1858
        %v1860 = vrot.slane %v1859, 1
        %v1861 = vmax.f32 %v1859, %v1860
        %v1862 = vsub.f32 %v1806, %v1819
        %v1863 = vsub.f32 %v1807, %v1825
        %v1864 = vsub.f32 %v1808, %v1831
        %v1865 = vsub.f32 %v1809, %v1837
        %v1866 = vsub.f32 %v1810, %v1843
        %v1867 = vsub.f32 %v1811, %v1849
        %v1868 = vsub.f32 %v1812, %v1855
        %v1869 = vsub.f32 %v1813, %v1861
        %v1870 = vmul.f32 %v1862, 1.442695
        %v1871 = vpow.pop %v1870
        %v1872 = vmul.f32 %v1863, 1.442695
        %v1873 = vpow.pop %v1872
        %v1874 = vmul.f32 %v1864, 1.442695
        %v1875 = vpow.pop %v1874
        %v1876 = vmul.f32 %v1865, 1.442695
        %v1877 = vpow.pop %v1876
        %v1878 = vmul.f32 %v1866, 1.442695
        %v1879 = vpow.pop %v1878
        %v1880 = vmul.f32 %v1867, 1.442695
        %v1881 = vpow.pop %v1880
        %v1882 = vmul.f32 %v1868, 1.442695
        %v1883 = vpow.pop %v1882
        %v1884 = vmul.f32 %v1869, 1.442695
        %v1885 = vpow.pop %v1884
        %v1886 = vmul.f32 %v536, %v1871
        %v1887 = vmul.f32 %v554, %v1873
        %v1888 = vmul.f32 %v572, %v1875
        %v1889 = vmul.f32 %v590, %v1877
        %v1890 = vmul.f32 %v608, %v1879
        %v1891 = vmul.f32 %v626, %v1881
        %v1892 = vmul.f32 %v644, %v1883
        %v1893 = vmul.f32 %v662, %v1885
        %v1894 = vrot.slane %v1886, 4
        %v1895 = vadd.f32 %v1886, %v1894
        %v1896 = vrot.slane %v1895, 2
        %v1897 = vadd.f32 %v1895, %v1896
        %v1898 = vrot.slane %v1897, 1
        %v1899 = vadd.f32 %v1897, %v1898
        %v1900 = vrot.slane %v1887, 4
        %v1901 = vadd.f32 %v1887, %v1900
        %v1902 = vrot.slane %v1901, 2
        %v1903 = vadd.f32 %v1901, %v1902
        %v1904 = vrot.slane %v1903, 1
        %v1905 = vadd.f32 %v1903, %v1904
        %v1906 = vrot.slane %v1888, 4
        %v1907 = vadd.f32 %v1888, %v1906
        %v1908 = vrot.slane %v1907, 2
        %v1909 = vadd.f32 %v1907, %v1908
        %v1910 = vrot.slane %v1909, 1
        %v1911 = vadd.f32 %v1909, %v1910
        %v1912 = vrot.slane %v1889, 4
        %v1913 = vadd.f32 %v1889, %v1912
        %v1914 = vrot.slane %v1913, 2
        %v1915 = vadd.f32 %v1913, %v1914
        %v1916 = vrot.slane %v1915, 1
        %v1917 = vadd.f32 %v1915, %v1916
        %v1918 = vrot.slane %v1890, 4
        %v1919 = vadd.f32 %v1890, %v1918
        %v1920 = vrot.slane %v1919, 2
        %v1921 = vadd.f32 %v1919, %v1920
        %v1922 = vrot.slane %v1921, 1
        %v1923 = vadd.f32 %v1921, %v1922
        %v1924 = vrot.slane %v1891, 4
        %v1925 = vadd.f32 %v1891, %v1924
        %v1926 = vrot.slane %v1925, 2
        %v1927 = vadd.f32 %v1925, %v1926
        %v1928 = vrot.slane %v1927, 1
        %v1929 = vadd.f32 %v1927, %v1928
        %v1930 = vrot.slane %v1892, 4
        %v1931 = vadd.f32 %v1892, %v1930
        %v1932 = vrot.slane %v1931, 2
        %v1933 = vadd.f32 %v1931, %v1932
        %v1934 = vrot.slane %v1933, 1
        %v1935 = vadd.f32 %v1933, %v1934
        %v1936 = vrot.slane %v1893, 4
        %v1937 = vadd.f32 %v1893, %v1936
        %v1938 = vrot.slane %v1937, 2
        %v1939 = vadd.f32 %v1937, %v1938
        %v1940 = vrot.slane %v1939, 1
        %v1941 = vadd.f32 %v1939, %v1940
        %v1942 = vrot.slane %v1871, 4
        %v1943 = vadd.f32 %v1871, %v1942
        %v1944 = vrot.slane %v1943, 2
        %v1945 = vadd.f32 %v1943, %v1944
        %v1946 = vrot.slane %v1945, 1
        %v1947 = vadd.f32 %v1945, %v1946
        %v1948 = vrot.slane %v1873, 4
        %v1949 = vadd.f32 %v1873, %v1948
        %v1950 = vrot.slane %v1949, 2
        %v1951 = vadd.f32 %v1949, %v1950
        %v1952 = vrot.slane %v1951, 1
        %v1953 = vadd.f32 %v1951, %v1952
        %v1954 = vrot.slane %v1875, 4
        %v1955 = vadd.f32 %v1875, %v1954
        %v1956 = vrot.slane %v1955, 2
        %v1957 = vadd.f32 %v1955, %v1956
        %v1958 = vrot.slane %v1957, 1
        %v1959 = vadd.f32 %v1957, %v1958
        %v1960 = vrot.slane %v1877, 4
        %v1961 = vadd.f32 %v1877, %v1960
        %v1962 = vrot.slane %v1961, 2
        %v1963 = vadd.f32 %v1961, %v1962
        %v1964 = vrot.slane %v1963, 1
        %v1965 = vadd.f32 %v1963, %v1964
        %v1966 = vrot.slane %v1879, 4
        %v1967 = vadd.f32 %v1879, %v1966
        %v1968 = vrot.slane %v1967, 2
        %v1969 = vadd.f32 %v1967, %v1968
        %v1970 = vrot.slane %v1969, 1
        %v1971 = vadd.f32 %v1969, %v1970
        %v1972 = vrot.slane %v1881, 4
        %v1973 = vadd.f32 %v1881, %v1972
        %v1974 = vrot.slane %v1973, 2
        %v1975 = vadd.f32 %v1973, %v1974
        %v1976 = vrot.slane %v1975, 1
        %v1977 = vadd.f32 %v1975, %v1976
        %v1978 = vrot.slane %v1883, 4
        %v1979 = vadd.f32 %v1883, %v1978
        %v1980 = vrot.slane %v1979, 2
        %v1981 = vadd.f32 %v1979, %v1980
        %v1982 = vrot.slane %v1981, 1
        %v1983 = vadd.f32 %v1981, %v1982
        %v1984 = vrot.slane %v1885, 4
        %v1985 = vadd.f32 %v1885, %v1984
        %v1986 = vrot.slane %v1985, 2
        %v1987 = vadd.f32 %v1985, %v1986
        %v1988 = vrot.slane %v1987, 1
        %v1989 = vadd.f32 %v1987, %v1988
        %v1990 = vrcp.pop %v1947
        %v1991 = vmul.f32 1.0, %v1990
        %v1992 = vrcp.pop %v1953
        %v1993 = vmul.f32 1.0, %v1992
        %v1994 = vrcp.pop %v1959
        %v1995 = vmul.f32 1.0, %v1994
        %v1996 = vrcp.pop %v1965
        %v1997 = vmul.f32 1.0, %v1996
        %v1998 = vrcp.pop %v1971
        %v1999 = vmul.f32 1.0, %v1998
        %v2000 = vrcp.pop %v1977
        %v2001 = vmul.f32 1.0, %v2000
        %v2002 = vrcp.pop %v1983
        %v2003 = vmul.f32 1.0, %v2002
        %v2004 = vrcp.pop %v1989
        %v2005 = vmul.f32 1.0, %v2004
        %v2006 = vmul.f32 %v1899, %v1991
        %v2007 = vmul.f32 %v1905, %v1993
        %v2008 = vmul.f32 %v1911, %v1995
        %v2009 = vmul.f32 %v1917, %v1997
        %v2010 = vmul.f32 %v1923, %v1999
        %v2011 = vmul.f32 %v1929, %v2001
        %v2012 = vmul.f32 %v1935, %v2003
        %v2013 = vmul.f32 %v1941, %v2005
        %vm2014 = vcmask 1041409
        %v2015 = vsel %vm2014, %v1054, %v1053
        %vm2016 = vcmask 1042434
        %v2017 = vsel %vm2016, %v1055, %v2015
        %vm2018 = vcmask 1043459
        %v2019 = vsel %vm2018, %v1056, %v2017
        %vm2020 = vcmask 1044484
        %v2021 = vsel %vm2020, %v1057, %v2019
        %vm2022 = vcmask 1045509
        %v2023 = vsel %vm2022, %v1058, %v2021
        %vm2024 = vcmask 1046534
        %v2025 = vsel %vm2024, %v1059, %v2023
        %vm2026 = vcmask 1047559
        %v2027 = vsel %vm2026, %v1060, %v2025
        %v2029 = vsel %vm2014, %v1367, %v1366
        %v2030 = vsel %vm2016, %v1368, %v2029
        %v2031 = vsel %vm2018, %v1369, %v2030
        %v2032 = vsel %vm2020, %v1370, %v2031
        %v2033 = vsel %vm2022, %v1371, %v2032
        %v2034 = vsel %vm2024, %v1372, %v2033
        %v2035 = vsel %vm2026, %v1373, %v2034
        %2036 = vrot.lane.b32.xlu0 %v2035, 96
        %v2037 = vpop.permute.xlu0 %2036
        %v2047 = vsel %vm2014, %v1695, %v1694
        %v2048 = vsel %vm2016, %v1696, %v2047
        %v2049 = vsel %vm2018, %v1697, %v2048
        %v2050 = vsel %vm2020, %v1698, %v2049
        %v2051 = vsel %vm2022, %v1699, %v2050
        %v2052 = vsel %vm2024, %v1700, %v2051
        %v2053 = vsel %vm2026, %v1701, %v2052
        %2054 = vrot.lane.b32.xlu0 %v2053, 64
        %v2055 = vpop.permute.xlu0 %2054
        %v2065 = vsel %vm2014, %v2007, %v2006
        %v2066 = vsel %vm2016, %v2008, %v2065
        %v2067 = vsel %vm2018, %v2009, %v2066
        %v2068 = vsel %vm2020, %v2010, %v2067
        %v2069 = vsel %vm2022, %v2011, %v2068
        %v2070 = vsel %vm2024, %v2012, %v2069
        %v2071 = vsel %vm2026, %v2013, %v2070
        %2072 = vrot.lane.b32.xlu0 %v2071, 32
        %v2073 = vpop.permute.xlu0 %2072
        %v2075 = vsel %vm382, %v2027, %v2037
        %v2076 = vsel %vm769, %v2075, %v2055
        %v2077 = vsel %vm1085, %v2076, %v2073
        %2078 = vst [vmem:[%s334] sm:$0xff] %v2077
        %s2079 = sand.u32 %s154, 1
        %s2080 = scalar_lea.sflag [#allocation4], %s2079
        %s2081 = sand.u32 %s154, 1
        %s2082 = smul.addr %s2081, 8
        %s2083 = scalar_lea.vmem [#allocation10], %s2082
        // Predicated region
        $region57: #{_lambda_.1} parent=39 // pred_check
          %p2084 = pneg %p164
        $region58: #{_lambda_.1} parent=39 // pred_check_branch
          %2086 = sbr.rel (%p2084) target = $region60
        $region59: #{_lambda_.1} parent=39 // pred_region
          %s2088 = ssub.s32 128, 128
          %2089 = vsyncadd %s2080, %s2088
          %s2090 = smul.addr %s26, 128
          %s2091 = scalar_lea.hbm %s5, %s2090
          %s2093 = sshll.u32 %s2083, 4
          %s2094 = int_to_ptr.vmem [resolvable:$true] %s2093
          %2096 = dma.vmem_to_hbm [thread:$0]  %s2094, 128, %s2091, %s2080
        $region60: #{_lambda_.1} parent=39 // pred_fallthru
          _
      $region40: #{_lambda_.1} parent=5 // pred_fallthru
        _
      %p2097 = scmp.le.s32.totalorder 2, %s21
      // Predicated region
      $region61: #{_lambda_.1} parent=5 // pred_check
        %p2098 = pneg %p2097
      $region62: #{_lambda_.1} parent=5 // pred_check_branch
        %2100 = sbr.rel (%p2098) target = $region64
      $region63: #{_lambda_.1} parent=5 // pred_region
        %s2101 = ssub.s32 %s21, 2
        // Predicated region
        $region65: #{_lambda_.1} parent=63 // pred_check
          %p2102 = pneg %p170
        $region66: #{_lambda_.1} parent=63 // pred_check_branch
          %2104 = sbr.rel (%p2102) target = $region68
        $region67: #{_lambda_.1} parent=63 // pred_region
          %s2105 = sand.u32 %s155, 1
          %s2106 = scalar_lea.sflag [#allocation4], %s2105
          %s2107 = sand.u32 %s155, 1
          %s2108 = smul.addr %s2107, 8
          %s2109 = scalar_lea.vmem [#allocation10], %s2108
          %2110 = dma.done %s2106, 128
        $region68: #{_lambda_.1} parent=63 // pred_fallthru
          _
      $region64: #{_lambda_.1} parent=5 // pred_fallthru
        _
    $region6: #{_lambda_.1} parent=1 // loop_footer
      %s25 = sadd.s32 1, %s21
    $region7: #{_lambda_.1} parent=1 // loop_footer_branch
      %20 = sbr.rel target = $region3
    $region8: #{_lambda_.1} parent=1 // loop_exit
      _
    %2111 = vsyncpa [#allocation3], 1
    %s2112 = scalar_lea.sflag [#allocation3], 1
    %2113 = vsyncpa %s2112, 1
    %2114 = vsyncpa [#allocation6], 1
    %s2115 = scalar_lea.sflag [#allocation6], 1
    %2116 = vsyncpa %s2115, 1
    %2117 = vsyncpa [#allocation9], 1
    %2118 = vsyncpa [#allocation4], 1
    %s2119 = scalar_lea.sflag [#allocation4], 1
    %2120 = vsyncpa %s2119, 1

</llo_original>
